<compile_context>
chip_gen: v7x
topology: tpu7x:2x2x1
jax: 0.10.0
libtpu: 0.0.40
codegen_flags: <defaults>
</compile_context>

<pallas_src>
import math

import jax
import jax.numpy as jnp
from jax.experimental import pallas as pl
from jax.experimental.pallas import tpu as pltpu

LANE = 128  # TPU lane width; feature dims are zero-padded to this


def _round_up(x, m):
    return ((x + m - 1) // m) * m


def _recurrent_gcn_kernel(s_ref, xk_ref, xrows_ref, wt0_ref, wt1_ref, bg_ref,
                          wlin_ref, blin_ref, out_ref, sx_acc):
    """Grid = (row tiles, K tiles).  K axis accumulates SX; epilogue at k==last."""
    f32 = jnp.float32
    bf16 = jnp.bfloat16
    k = pl.program_id(1)

    @pl.when(k == 0)
    def _():
        sx_acc[...] = jnp.zeros_like(sx_acc)

    # Chebyshev T1 partial sum for this (row, K) block: SX += S[rows, kcols] @ X[kcols, :]
    sx_acc[...] += jnp.dot(s_ref[...], xk_ref[...], preferred_element_type=f32)

    @pl.when(k == pl.num_programs(1) - 1)
    def _():
        fp = out_ref.shape[1]  # padded per-gate width (128)
        # Fused z / h~ gate pre-activations, 2*LANE lanes wide:
        #   G = [preZ | preH~] = X_rows @ Wt0 + SX @ Wt1 + (bx + bh)
        # (r-gate and all H-side weights are dead because the initial hidden state is 0.)
        g = jnp.dot(xrows_ref[...], wt0_ref[...], preferred_element_type=f32)
        g = g + jnp.dot(sx_acc[...].astype(bf16), wt1_ref[...],
                        preferred_element_type=f32)
        g = g + bg_ref[...]

        z = jax.nn.sigmoid(g[:, :fp])        # update gate (f32 gate math)
        h_tilde = jnp.tanh(g[:, fp:])        # candidate state
        h_relu = jnp.maximum((1.0 - z) * h_tilde, 0.0)   # H = (1-Z)*H~ ; F.relu

        # Linear(filters, 1), lane-padded to a dense 128-wide store; column 0 is the result.
        out_ref[...] = (jnp.dot(h_relu.astype(bf16), wlin_ref[...],
                                preferred_element_type=f32) + blin_ref[...])


def build_cheb_propagation_padded(edge_index, edge_weight, num_nodes, n_pad):
    """Padded bf16 S = L_hat = -D^{-1/2} A D^{-1/2} (lambda_max = 2.0), exactly the
    PyG ChebConv K=2 propagation matrix, built with a single O(N^2) scatter pass
    (degree + edge scaling computed on the O(E) edge list)."""
    row, col = edge_index[0], edge_index[1]
    deg = jnp.zeros((num_nodes,), jnp.float32).at[row].add(edge_weight)
    dinv = jnp.where(deg > 0.0, jax.lax.rsqrt(deg), 0.0)
    w = (-(dinv[row] * edge_weight * dinv[col])).astype(jnp.bfloat16)
    return jnp.zeros((n_pad, n_pad), jnp.bfloat16).at[row, col].add(w)


def _pack_gate_weights(params, fin, filt):
    """Pack ChebConv-K=2 weights of the z and h~ gates into lane-padded fused
    (LANE, 2*LANE) matrices for the T0 (X) and T1 (S@X) terms plus a fused bias,
    and pad Linear(filters, 1) to a lane-dense (LANE, LANE) weight.

    Gate order in wx/bx/bh is (z, r, h).  The r gate and all H-side weights (wh)
    are dropped: with H0 == 0 the H-side convs contribute only their biases."""
    wx, bx, bh = params["wx"], params["bx"], params["bh"]
    wt0 = jnp.zeros((LANE, 2 * LANE), jnp.float32)
    wt1 = jnp.zeros((LANE, 2 * LANE), jnp.float32)
    bg = jnp.zeros((1, 2 * LANE), jnp.float32)
    for colblk, k in enumerate((0, 2)):  # 0 -> z gate, 2 -> h~ gate
        lo = colblk * LANE
        wt0 = wt0.at[:fin, lo:lo + filt].set(wx[k, 0])
        wt1 = wt1.at[:fin, lo:lo + filt].set(wx[k, 1])
        bg = bg.at[0, lo:lo + filt].set(bx[k, 0] + bh[k, 0])
    wlin = jnp.zeros((LANE, LANE), jnp.float32).at[:filt, 0].set(params["wlin"][:, 0])
    blin = jnp.zeros((1, LANE), jnp.float32).at[0, 0].set(params["blin"][0, 0])
    return (wt0.astype(jnp.bfloat16), wt1.astype(jnp.bfloat16), bg,
            wlin.astype(jnp.bfloat16), blin)


def _vmem_limit_bytes():
    """Generation-aware scoped-VMEM limit: 64 MiB on 128-MiB parts (v5e/v6e),
    ~3/4 of physical capacity (~48 MiB) on 64-MiB parts (v7x)."""
    cap = 128 * 1024 * 1024
    try:
        cap = pltpu.get_tpu_info().vmem_capacity_bytes
    except Exception:
        pass
    return int(min(64 * 1024 * 1024, (cap * 3) // 4))


def _choose_tiles(n, tile_m, tile_k):
    """Pick (n_pad, tile_m, tile_k).  Small graphs (bf16 S <= 8 MiB, N <~ 2k)
    collapse to a single grid step so the ~0.35 us/step grid overhead vanishes;
    large graphs stream S in roofline-sized (tile_m, tile_k) blocks whose VMEM
    footprint is independent of N."""
    n128 = _round_up(n, LANE)
    if n128 * n128 * 2 <= 8 * 1024 * 1024:
        return n128, n128, n128
    tile_m = _round_up(min(tile_m, n128), 8)
    tile_k = _round_up(min(tile_k, n128), LANE)
    step = math.lcm(tile_m, tile_k)
    n_pad = _round_up(n, step)
    return n_pad, tile_m, tile_k


def recurrent_gcn_forward(x, edge_index, edge_weight, params, *,
                          tile_m=512, tile_k=512):
    """RecurrentGCN.forward.  GConvGRU hidden state defaults to zeros (the module
    never passes H) and the kernel is specialized to that.  For a static graph,
    callers should cache the output of build_cheb_propagation_padded / x padding
    across calls (pure JAX glue)."""
    n, fin = x.shape
    filt = params["wx"].shape[-1]
    assert fin <= LANE and filt <= LANE

    n_pad, tile_m, tile_k = _choose_tiles(n, tile_m, tile_k)

    # Dense bf16 propagation matrix (padded), bf16 node features (lane-padded).
    s_pad = build_cheb_propagation_padded(edge_index, edge_weight, n, n_pad)
    x_pad = jnp.zeros((n_pad, LANE), jnp.bfloat16).at[:n, :fin].set(
        x.astype(jnp.bfloat16))

    wt0, wt1, bg, wlin, blin = _pack_gate_weights(params, fin, filt)

    def resident(shape):
        return pl.BlockSpec(shape, lambda i, k: (0,) * len(shape))

    grid = (n_pad // tile_m, n_pad // tile_k)

    out_pad = pl.pallas_call(
        _recurrent_gcn_kernel,
        out_shape=jax.ShapeDtypeStruct((n_pad, LANE), jnp.float32),
        grid=grid,
        in_specs=[
            pl.BlockSpec((tile_m, tile_k), lambda i, k: (i, k)),  # S block (streamed)
            pl.BlockSpec((tile_k, LANE), lambda i, k: (k, 0)),    # X K-block (RHS of S@X)
            pl.BlockSpec((tile_m, LANE), lambda i, k: (i, 0)),    # X row block (T0 term)
            resident((LANE, 2 * LANE)),                           # fused T0 gate weights
            resident((LANE, 2 * LANE)),                           # fused T1 gate weights
            resident((1, 2 * LANE)),                              # fused gate bias
            resident((LANE, LANE)),                               # padded Linear weight
            resident((1, LANE)),                                  # padded Linear bias
        ],
        out_specs=pl.BlockSpec((tile_m, LANE), lambda i, k: (i, 0)),
        scratch_shapes=[pltpu.VMEM((tile_m, LANE), jnp.float32)],  # SX accumulator
        compiler_params=pltpu.CompilerParams(
            dimension_semantics=("parallel", "arbitrary"),  # rows parallel, K reduction
            vmem_limit_bytes=_vmem_limit_bytes()),
    )(s_pad, x_pad, x_pad, wt0, wt1, bg, wlin, blin)

    return out_pad[:n, :1]


if __name__ == "__main__":
    key = jax.random.PRNGKey(0)
    N, Fin, F = 256, 8, 32  # nodes, node_features, filters

    k_x, k_w, k_e = jax.random.split(key, 3)
    x = jax.random.normal(k_x, (N, Fin), jnp.float32)

    # simple bidirectional ring graph
    src = jnp.arange(N, dtype=jnp.int32)
    dst = (src + 1) % N
    edge_index = jnp.stack([jnp.concatenate([src, dst]),
                            jnp.concatenate([dst, src])], axis=0)
    edge_weight = jax.random.uniform(k_e, (2 * N,), jnp.float32, 0.5, 1.5)

    # Deterministic synthetic parameters matching the PyTorch module layout:
    # ChebConv(in, out, K=2) = 2 weight matrices + 1 bias, stacked over gates (z, r, h).
    ks = jax.random.split(k_w, 6)
    scale = 0.1
    params = {
        "wx":   scale * jax.random.normal(ks[0], (3, 2, Fin, F), jnp.float32),
        "wh":   scale * jax.random.normal(ks[1], (3, 2, F, F), jnp.float32),  # dead: H0 == 0
        "bx":   scale * jax.random.normal(ks[2], (3, 1, F), jnp.float32),
        "bh":   scale * jax.random.normal(ks[3], (3, 1, F), jnp.float32),
        "wlin": scale * jax.random.normal(ks[4], (F, 1), jnp.float32),  # Linear(filters,1).weight.T
        "blin": scale * jax.random.normal(ks[5], (1, 1), jnp.float32),  # Linear bias
    }

    out = recurrent_gcn_forward(x, edge_index, edge_weight, params)
    jax.block_until_ready(out)
    assert out.shape == (N, 1) and out.dtype == jnp.float32
    print("KERNEL_OK")
</pallas_src>

<mosaic_0001>
module attributes {stable_mosaic.version = 11 : i64} {
  func.func @_recurrent_gcn_kernel(%arg0: i32, %arg1: i32, %arg2: memref<256x256xbf16, #tpu.memory_space<vmem>>, %arg3: memref<256x128xbf16, #tpu.memory_space<vmem>>, %arg4: memref<256x128xbf16, #tpu.memory_space<vmem>>, %arg5: memref<128x256xbf16, #tpu.memory_space<vmem>>, %arg6: memref<128x256xbf16, #tpu.memory_space<vmem>>, %arg7: memref<1x256xf32, #tpu.memory_space<vmem>>, %arg8: memref<128x128xbf16, #tpu.memory_space<vmem>>, %arg9: memref<1x128xf32, #tpu.memory_space<vmem>>, %arg10: memref<256x128xf32, #tpu.memory_space<vmem>>, %arg11: memref<256x128xf32, #tpu.memory_space<vmem>>) attributes {dimension_semantics = [#tpu.dimension_semantics<parallel>, #tpu.dimension_semantics<arbitrary>], iteration_bounds = array<i64: 1, 1>, scalar_prefetch = 0 : i64, scratch_operands = 1 : i64, tpu.core_type = #tpu.core_type<tc>, window_params = [{transform_indices = @transform_0, window_bounds = array<i64: 256, 256>}, {transform_indices = @transform_1, window_bounds = array<i64: 256, 128>}, {transform_indices = @transform_2, window_bounds = array<i64: 256, 128>}, {pipeline_mode = #tpu.pipeline_mode<synchronous>, transform_indices = @transform_3, window_bounds = array<i64: 128, 256>}, {pipeline_mode = #tpu.pipeline_mode<synchronous>, transform_indices = @transform_4, window_bounds = array<i64: 128, 256>}, {pipeline_mode = #tpu.pipeline_mode<synchronous>, transform_indices = @transform_5, window_bounds = array<i64: 1, 256>}, {pipeline_mode = #tpu.pipeline_mode<synchronous>, transform_indices = @transform_6, window_bounds = array<i64: 128, 128>}, {pipeline_mode = #tpu.pipeline_mode<synchronous>, transform_indices = @transform_7, window_bounds = array<i64: 1, 128>}, {transform_indices = @transform_8, window_bounds = array<i64: 256, 128>}]} {
    %c0_i32 = arith.constant 0 : i32
    %0 = arith.cmpi eq, %arg1, %c0_i32 : i32
    %1 = arith.extui %0 : i1 to i32
    %c0_i32_0 = arith.constant 0 : i32
    %2 = arith.cmpi ne, %1, %c0_i32_0 : i32
    scf.if %2 {
      %cst_10 = arith.constant 0.000000e+00 : f32
      %12 = vector.broadcast %cst_10 : f32 to vector<256x128xf32>
      %c0_11 = arith.constant 0 : index
      %c0_12 = arith.constant 0 : index
      %13 = vector.load %arg11[%c0_11, %c0_12] : memref<256x128xf32, #tpu.memory_space<vmem>>, vector<256x128xf32>
      tpu.vector_store %arg11[%c0_11, %c0_12], %12 {strides = array<i32>} : memref<256x128xf32, #tpu.memory_space<vmem>>, vector<256x128xf32>,
    } else {
    }
    %c0 = arith.constant 0 : index
    %c0_1 = arith.constant 0 : index
    %3 = vector.load %arg11[%c0, %c0_1] : memref<256x128xf32, #tpu.memory_space<vmem>>, vector<256x128xf32>
    %c0_2 = arith.constant 0 : index
    %c0_3 = arith.constant 0 : index
    %4 = vector.load %arg2[%c0_2, %c0_3] : memref<256x256xbf16, #tpu.memory_space<vmem>>, vector<256x256xbf16>
    %c0_4 = arith.constant 0 : index
    %c0_5 = arith.constant 0 : index
    %5 = vector.load %arg3[%c0_4, %c0_5] : memref<256x128xbf16, #tpu.memory_space<vmem>>, vector<256x128xbf16>
    %cst = arith.constant dense<0.000000e+00> : vector<256x128xf32>
    %6 = tpu.matmul %4, %5, %cst {dimension_numbers = #tpu.dot_dimension_numbers<[1], [0], [0], [1], [0, 0, 1, 1], [], []>} : vector<256x256xbf16>, vector<256x128xbf16>, vector<256x128xf32> -> vector<256x128xf32>
    %7 = arith.addf %3, %6 : vector<256x128xf32>
    %c0_6 = arith.constant 0 : index
    %c0_7 = arith.constant 0 : index
    %8 = vector.load %arg11[%c0_6, %c0_7] : memref<256x128xf32, #tpu.memory_space<vmem>>, vector<256x128xf32>
    tpu.vector_store %arg11[%c0_6, %c0_7], %7 {strides = array<i32>} : memref<256x128xf32, #tpu.memory_space<vmem>>, vector<256x128xf32>,
    %c0_i32_8 = arith.constant 0 : i32
    %9 = arith.cmpi eq, %arg1, %c0_i32_8 : i32
    %10 = arith.extui %9 : i1 to i32
    %c0_i32_9 = arith.constant 0 : i32
    %11 = arith.cmpi ne, %10, %c0_i32_9 : i32
    scf.if %11 {
      %c0_10 = arith.constant 0 : index
      %c0_11 = arith.constant 0 : index
      %12 = vector.load %arg4[%c0_10, %c0_11] : memref<256x128xbf16, #tpu.memory_space<vmem>>, vector<256x128xbf16>
      %c0_12 = arith.constant 0 : index
      %c0_13 = arith.constant 0 : index
      %13 = vector.load %arg5[%c0_12, %c0_13] : memref<128x256xbf16, #tpu.memory_space<vmem>>, vector<128x256xbf16>
      %cst_14 = arith.constant dense<0.000000e+00> : vector<256x256xf32>
      %14 = tpu.matmul %12, %13, %cst_14 {dimension_numbers = #tpu.dot_dimension_numbers<[1], [0], [0], [1], [0, 0, 1, 1], [], []>} : vector<256x128xbf16>, vector<128x256xbf16>, vector<256x256xf32> -> vector<256x256xf32>
      %c0_15 = arith.constant 0 : index
      %c0_16 = arith.constant 0 : index
      %15 = vector.load %arg11[%c0_15, %c0_16] : memref<256x128xf32, #tpu.memory_space<vmem>>, vector<256x128xf32>
      %16 = arith.truncf %15 : vector<256x128xf32> to vector<256x128xbf16>
      %c0_17 = arith.constant 0 : index
      %c0_18 = arith.constant 0 : index
      %17 = vector.load %arg6[%c0_17, %c0_18] : memref<128x256xbf16, #tpu.memory_space<vmem>>, vector<128x256xbf16>
      %cst_19 = arith.constant dense<0.000000e+00> : vector<256x256xf32>
      %18 = tpu.matmul %16, %17, %cst_19 {dimension_numbers = #tpu.dot_dimension_numbers<[1], [0], [0], [1], [0, 0, 1, 1], [], []>} : vector<256x128xbf16>, vector<128x256xbf16>, vector<256x256xf32> -> vector<256x256xf32>
      %19 = arith.addf %14, %18 : vector<256x256xf32>
      %c0_20 = arith.constant 0 : index
      %c0_21 = arith.constant 0 : index
      %20 = vector.load %arg7[%c0_20, %c0_21] : memref<1x256xf32, #tpu.memory_space<vmem>>, vector<1x256xf32>
      %21 = vector.broadcast %20 : vector<1x256xf32> to vector<256x256xf32>
      %22 = arith.addf %19, %21 : vector<256x256xf32>
      %23 = vector.extract_strided_slice %22 {offsets = [0, 0], sizes = [256, 128], strides = [1, 1]} : vector<256x256xf32> to vector<256x128xf32>
      %24 = arith.negf %23 : vector<256x128xf32>
      %25 = math.exp %24 : vector<256x128xf32>
      %cst_22 = arith.constant 1.000000e+00 : f32
      %26 = vector.broadcast %cst_22 : f32 to vector<256x128xf32>
      %27 = arith.addf %26, %25 : vector<256x128xf32>
      %28 = arith.divf %26, %27 : vector<256x128xf32>
      %29 = vector.extract_strided_slice %22 {offsets = [0, 128], sizes = [256, 128], strides = [1, 1]} : vector<256x256xf32> to vector<256x128xf32>
      %30 = math.tanh %29 : vector<256x128xf32>
      %cst_23 = arith.constant 1.000000e+00 : f32
      %31 = vector.broadcast %cst_23 : f32 to vector<256x128xf32>
      %32 = arith.subf %31, %28 : vector<256x128xf32>
      %33 = arith.mulf %32, %30 : vector<256x128xf32>
      %cst_24 = arith.constant 0.000000e+00 : f32
      %34 = vector.broadcast %cst_24 : f32 to vector<256x128xf32>
      %35 = arith.maximumf %33, %34 : vector<256x128xf32>
      %36 = arith.truncf %35 : vector<256x128xf32> to vector<256x128xbf16>
      %c0_25 = arith.constant 0 : index
      %c0_26 = arith.constant 0 : index
      %37 = vector.load %arg8[%c0_25, %c0_26] : memref<128x128xbf16, #tpu.memory_space<vmem>>, vector<128x128xbf16>
      %cst_27 = arith.constant dense<0.000000e+00> : vector<256x128xf32>
      %38 = tpu.matmul %36, %37, %cst_27 {dimension_numbers = #tpu.dot_dimension_numbers<[1], [0], [0], [1], [0, 0, 1, 1], [], []>} : vector<256x128xbf16>, vector<128x128xbf16>, vector<256x128xf32> -> vector<256x128xf32>
      %c0_28 = arith.constant 0 : index
      %c0_29 = arith.constant 0 : index
      %39 = vector.load %arg9[%c0_28, %c0_29] : memref<1x128xf32, #tpu.memory_space<vmem>>, vector<1x128xf32>
      %40 = vector.broadcast %39 : vector<1x128xf32> to vector<256x128xf32>
      %41 = arith.addf %38, %40 : vector<256x128xf32>
      %c0_30 = arith.constant 0 : index
      %c0_31 = arith.constant 0 : index
      %42 = vector.load %arg10[%c0_30, %c0_31] : memref<256x128xf32, #tpu.memory_space<vmem>>, vector<256x128xf32>
      tpu.vector_store %arg10[%c0_30, %c0_31], %41 {strides = array<i32>} : memref<256x128xf32, #tpu.memory_space<vmem>>, vector<256x128xf32>,
    } else {
    }
    return
  }
  func.func @transform_0(%arg0: i32, %arg1: i32) -> (i32, i32) {
    %c0_i32 = arith.constant 0 : i32
    return %arg0, %arg1 : i32, i32
  }
  func.func @transform_1(%arg0: i32, %arg1: i32) -> (i32, i32) {
    %c0_i32 = arith.constant 0 : i32
    %c0_i32_0 = arith.constant 0 : i32
    return %arg1, %c0_i32 : i32, i32
  }
  func.func @transform_2(%arg0: i32, %arg1: i32) -> (i32, i32) {
    %c0_i32 = arith.constant 0 : i32
    %c0_i32_0 = arith.constant 0 : i32
    return %arg0, %c0_i32 : i32, i32
  }
  func.func @transform_3(%arg0: i32, %arg1: i32) -> (i32, i32) {
    %c0_i32 = arith.constant 0 : i32
    %c0_i32_0 = arith.constant 0 : i32
    %c0_i32_1 = arith.constant 0 : i32
    return %c0_i32, %c0_i32_0 : i32, i32
  }
  func.func @transform_4(%arg0: i32, %arg1: i32) -> (i32, i32) {
    %c0_i32 = arith.constant 0 : i32
    %c0_i32_0 = arith.constant 0 : i32
    %c0_i32_1 = arith.constant 0 : i32
    return %c0_i32, %c0_i32_0 : i32, i32
  }
  func.func @transform_5(%arg0: i32, %arg1: i32) -> (i32, i32) {
    %c0_i32 = arith.constant 0 : i32
    %c0_i32_0 = arith.constant 0 : i32
    %c0_i32_1 = arith.constant 0 : i32
    return %c0_i32, %c0_i32_0 : i32, i32
  }
  func.func @transform_6(%arg0: i32, %arg1: i32) -> (i32, i32) {
    %c0_i32 = arith.constant 0 : i32
    %c0_i32_0 = arith.constant 0 : i32
    %c0_i32_1 = arith.constant 0 : i32
    return %c0_i32, %c0_i32_0 : i32, i32
  }
  func.func @transform_7(%arg0: i32, %arg1: i32) -> (i32, i32) {
    %c0_i32 = arith.constant 0 : i32
    %c0_i32_0 = arith.constant 0 : i32
    %c0_i32_1 = arith.constant 0 : i32
    return %c0_i32, %c0_i32_0 : i32, i32
  }
  func.func @transform_8(%arg0: i32, %arg1: i32) -> (i32, i32) {
    %c0_i32 = arith.constant 0 : i32
    %c0_i32_0 = arith.constant 0 : i32
    return %arg0, %c0_i32 : i32, i32
  }
}

</mosaic_0001>

<llo_original>
// kernel: tpu_custom_call.1
$region0: #{tpu_custom_call.1}
  #allocation0 [shape = 'u32[]', space=smem, size = 0x4, offset = 0x4, fixed_abs, tag = 'smem constant byte address 0x4 - core index']
  #allocation1 [shape = 'u32[144,128]{1,0:T(1,128)}', space=vmem, size = 0x12000, scoped, tag = 'internal scratch']
  #allocation2 [shape = 'f32[256,128]{1,0:T(8,128)}', space=vmem, size = 0x20000, scoped, tag = 'scratch operand']
  %s0 = inlined_call_operand.hbm [shape: bf16[256,256], index: 0, kind: input, shape index: {}]
  %s1 = inlined_call_operand.hbm [shape: bf16[256,128], index: 1, kind: input, shape index: {}]
  %s2 = inlined_call_operand.hbm [shape: bf16[256,128], index: 2, kind: input, shape index: {}]
  %s3 = inlined_call_operand.hbm [shape: bf16[128,256], index: 3, kind: input, shape index: {}]
  %s4 = inlined_call_operand.hbm [shape: bf16[128,256], index: 4, kind: input, shape index: {}]
  %s5 = inlined_call_operand.hbm [shape: f32[1,256], index: 5, kind: input, shape index: {}]
  %s6 = inlined_call_operand.hbm [shape: bf16[128,128], index: 6, kind: input, shape index: {}]
  %s7 = inlined_call_operand.hbm [shape: f32[1,128], index: 7, kind: input, shape index: {}]
  %s8 = inlined_call_operand.hbm [shape: f32[256,128], index: 8, kind: output, shape index: {}]
  %s9 = sld [smem:[#allocation0]]
  $region82: #{tpu_custom_call.1} parent=0
    _
  %s11 = ssub.s32 1, %s9
  %s12 = scalar_select 0, %s11, %s9
  $region1: #{tpu_custom_call.1} parent=0
    #allocation3 [shape = 'u8[131072]{0}', space=vmem, size = 0x20000, scoped, tag = 'input window, operand 0, single buffered']
    #allocation4 [shape = 's32[1]{0}', space=sflag, size = 0x4, scoped, tag = 'scoped memory for tpu_custom_call.1']
    #allocation5 [shape = 's32[1]{0}', space=sflag, size = 0x4, scoped, tag = 'scoped memory for tpu_custom_call.1']
    #allocation6 [shape = 'u8[65536]{0}', space=vmem, size = 0x10000, scoped, tag = 'input window, operand 1, single buffered']
    #allocation7 [shape = 's32[1]{0}', space=sflag, size = 0x4, scoped, tag = 'scoped memory for tpu_custom_call.1']
    #allocation8 [shape = 'u8[65536]{0}', space=vmem, size = 0x10000, scoped, tag = 'input window, operand 2, single buffered']
    #allocation9 [shape = 'u8[65536]{0}', space=vmem, size = 0x10000, scoped, tag = 'input window, operand 3, single buffered']
    #allocation10 [shape = 's32[1]{0}', space=sflag, size = 0x4, scoped, tag = 'scoped memory for tpu_custom_call.1']
    #allocation11 [shape = 'u8[65536]{0}', space=vmem, size = 0x10000, scoped, tag = 'input window, operand 4, single buffered']
    #allocation12 [shape = 'u8[1024]{0}', space=vmem, size = 0x400, scoped, tag = 'input window, operand 5, single buffered']
    #allocation13 [shape = 's32[1]{0}', space=sflag, size = 0x4, scoped, tag = 'scoped memory for tpu_custom_call.1']
    #allocation14 [shape = 'u8[32768]{0}', space=vmem, size = 0x8000, scoped, tag = 'input window, operand 6, single buffered']
    #allocation15 [shape = 'u8[512]{0}', space=vmem, size = 0x400, scoped, tag = 'input window, operand 7, single buffered']
    #allocation16 [shape = 's32[1]{0}', space=sflag, size = 0x4, scoped, tag = 'scoped memory for tpu_custom_call.1']
    #allocation17 [shape = 'u8[131072]{0}', space=vmem, size = 0x20000, scoped, tag = 'output window, operand 0, single buffered']
    %13 = vsyncpa [#allocation4], 0
    %14 = vsyncpa [#allocation7], 0
    %15 = vsyncpa [#allocation10], 0
    %16 = vsyncpa [#allocation13], 0
    %17 = vsyncpa [#allocation16], 0
    %18 = vsyncpa [#allocation5], 0
    // Predicated region
    $region2: #{tpu_custom_call.1} parent=1 // pred_check
      _
    $region3: #{tpu_custom_call.1} parent=1 // pred_check_branch
      %20 = sbr.rel (0) target = $region5
    $region4: #{tpu_custom_call.1} parent=1 // pred_region
      %s22 = ssub.s32 4096, 4096
      %23 = vsyncadd [#allocation4], %s22
      %s24 = sshll.u32 [#allocation3], 4
      %s25 = int_to_ptr.vmem [resolvable:$true] %s24
      %30 = dma.hbm_to_vmem [thread:$0]  %s0, 4096, %s25, [#allocation4], 128, 128, 8
    $region5: #{tpu_custom_call.1} parent=1 // pred_fallthru
      _
    // Predicated region
    $region6: #{tpu_custom_call.1} parent=1 // pred_check
      _
    $region7: #{tpu_custom_call.1} parent=1 // pred_check_branch
      %32 = sbr.rel (0) target = $region9
    $region8: #{tpu_custom_call.1} parent=1 // pred_region
      %s34 = ssub.s32 2048, 2048
      %35 = vsyncadd [#allocation7], %s34
      %s36 = sshll.u32 [#allocation6], 4
      %s37 = int_to_ptr.vmem [resolvable:$true] %s36
      %42 = dma.hbm_to_vmem [thread:$0]  %s1, 2048, %s37, [#allocation7], 64, 64, 4
    $region9: #{tpu_custom_call.1} parent=1 // pred_fallthru
      _
    // Predicated region
    $region10: #{tpu_custom_call.1} parent=1 // pred_check
      _
    $region11: #{tpu_custom_call.1} parent=1 // pred_check_branch
      %44 = sbr.rel (0) target = $region13
    $region12: #{tpu_custom_call.1} parent=1 // pred_region
      %s46 = ssub.s32 2048, 2048
      %47 = vsyncadd [#allocation7], %s46
      %s48 = sshll.u32 [#allocation8], 4
      %s49 = int_to_ptr.vmem [resolvable:$true] %s48
      %54 = dma.hbm_to_vmem [thread:$0]  %s2, 2048, %s49, [#allocation7], 64, 64, 4
    $region13: #{tpu_custom_call.1} parent=1 // pred_fallthru
      _
    // Predicated region
    $region14: #{tpu_custom_call.1} parent=1 // pred_check
      _
    $region15: #{tpu_custom_call.1} parent=1 // pred_check_branch
      %56 = sbr.rel (0) target = $region17
    $region16: #{tpu_custom_call.1} parent=1 // pred_region
      %s58 = ssub.s32 2048, 2048
      %59 = vsyncadd [#allocation10], %s58
      %s60 = sshll.u32 [#allocation9], 4
      %s61 = int_to_ptr.vmem [resolvable:$true] %s60
      %66 = dma.hbm_to_vmem [thread:$0]  %s3, 2048, %s61, [#allocation10], 128, 128, 8
    $region17: #{tpu_custom_call.1} parent=1 // pred_fallthru
      _
    // Predicated region
    $region18: #{tpu_custom_call.1} parent=1 // pred_check
      _
    $region19: #{tpu_custom_call.1} parent=1 // pred_check_branch
      %68 = sbr.rel (0) target = $region21
    $region20: #{tpu_custom_call.1} parent=1 // pred_region
      %s70 = ssub.s32 2048, 2048
      %71 = vsyncadd [#allocation10], %s70
      %s72 = sshll.u32 [#allocation11], 4
      %s73 = int_to_ptr.vmem [resolvable:$true] %s72
      %78 = dma.hbm_to_vmem [thread:$0]  %s4, 2048, %s73, [#allocation10], 128, 128, 8
    $region21: #{tpu_custom_call.1} parent=1 // pred_fallthru
      _
    // Predicated region
    $region22: #{tpu_custom_call.1} parent=1 // pred_check
      _
    $region23: #{tpu_custom_call.1} parent=1 // pred_check_branch
      %80 = sbr.rel (0) target = $region25
    $region24: #{tpu_custom_call.1} parent=1 // pred_region
      %s82 = ssub.s32 32, 32
      %83 = vsyncadd [#allocation13], %s82
      %s85 = sshll.u32 [#allocation12], 4
      %s86 = int_to_ptr.vmem [resolvable:$true] %s85
      %88 = dma.hbm_to_vmem [thread:$0]  %s5, 32, %s86, [#allocation13]
    $region25: #{tpu_custom_call.1} parent=1 // pred_fallthru
      _
    // Predicated region
    $region26: #{tpu_custom_call.1} parent=1 // pred_check
      _
    $region27: #{tpu_custom_call.1} parent=1 // pred_check_branch
      %90 = sbr.rel (0) target = $region29
    $region28: #{tpu_custom_call.1} parent=1 // pred_region
      %s92 = ssub.s32 1024, 1024
      %93 = vsyncadd [#allocation13], %s92
      %s94 = sshll.u32 [#allocation14], 4
      %s95 = int_to_ptr.vmem [resolvable:$true] %s94
      %100 = dma.hbm_to_vmem [thread:$0]  %s6, 1024, %s95, [#allocation13], 64, 64, 4
    $region29: #{tpu_custom_call.1} parent=1 // pred_fallthru
      _
    // Predicated region
    $region30: #{tpu_custom_call.1} parent=1 // pred_check
      _
    $region31: #{tpu_custom_call.1} parent=1 // pred_check_branch
      %102 = sbr.rel (0) target = $region33
    $region32: #{tpu_custom_call.1} parent=1 // pred_region
      %s104 = ssub.s32 16, 16
      %105 = vsyncadd [#allocation16], %s104
      %s107 = sshll.u32 [#allocation15], 4
      %s108 = int_to_ptr.vmem [resolvable:$true] %s107
      %110 = dma.hbm_to_vmem [thread:$0]  %s7, 16, %s108, [#allocation16]
    $region33: #{tpu_custom_call.1} parent=1 // pred_fallthru
      _
    // Predicated region
    $region34: #{tpu_custom_call.1} parent=1 // pred_check
      _
    $region35: #{tpu_custom_call.1} parent=1 // pred_check_branch
      %112 = sbr.rel (0) target = $region37
    $region36: #{tpu_custom_call.1} parent=1 // pred_region
      %113 = dma.done [#allocation4], 4096
    $region37: #{tpu_custom_call.1} parent=1 // pred_fallthru
      _
    // Predicated region
    $region38: #{tpu_custom_call.1} parent=1 // pred_check
      _
    $region39: #{tpu_custom_call.1} parent=1 // pred_check_branch
      %115 = sbr.rel (0) target = $region41
    $region40: #{tpu_custom_call.1} parent=1 // pred_region
      %116 = dma.done [#allocation7], 2048
    $region41: #{tpu_custom_call.1} parent=1 // pred_fallthru
      _
    // Predicated region
    $region42: #{tpu_custom_call.1} parent=1 // pred_check
      _
    $region43: #{tpu_custom_call.1} parent=1 // pred_check_branch
      %118 = sbr.rel (0) target = $region45
    $region44: #{tpu_custom_call.1} parent=1 // pred_region
      %119 = dma.done [#allocation7], 2048
    $region45: #{tpu_custom_call.1} parent=1 // pred_fallthru
      _
    // Predicated region
    $region46: #{tpu_custom_call.1} parent=1 // pred_check
      _
    $region47: #{tpu_custom_call.1} parent=1 // pred_check_branch
      %121 = sbr.rel (0) target = $region49
    $region48: #{tpu_custom_call.1} parent=1 // pred_region
      %122 = dma.done [#allocation10], 2048
    $region49: #{tpu_custom_call.1} parent=1 // pred_fallthru
      _
    // Predicated region
    $region50: #{tpu_custom_call.1} parent=1 // pred_check
      _
    $region51: #{tpu_custom_call.1} parent=1 // pred_check_branch
      %124 = sbr.rel (0) target = $region53
    $region52: #{tpu_custom_call.1} parent=1 // pred_region
      %125 = dma.done [#allocation10], 2048
    $region53: #{tpu_custom_call.1} parent=1 // pred_fallthru
      _
    // Predicated region
    $region54: #{tpu_custom_call.1} parent=1 // pred_check
      _
    $region55: #{tpu_custom_call.1} parent=1 // pred_check_branch
      %127 = sbr.rel (0) target = $region57
    $region56: #{tpu_custom_call.1} parent=1 // pred_region
      %128 = dma.done [#allocation13], 32
    $region57: #{tpu_custom_call.1} parent=1 // pred_fallthru
      _
    // Predicated region
    $region58: #{tpu_custom_call.1} parent=1 // pred_check
      _
    $region59: #{tpu_custom_call.1} parent=1 // pred_check_branch
      %130 = sbr.rel (0) target = $region61
    $region60: #{tpu_custom_call.1} parent=1 // pred_region
      %131 = dma.done [#allocation13], 1024
    $region61: #{tpu_custom_call.1} parent=1 // pred_fallthru
      _
    // Predicated region
    $region62: #{tpu_custom_call.1} parent=1 // pred_check
      _
    $region63: #{tpu_custom_call.1} parent=1 // pred_check_branch
      %133 = sbr.rel (0) target = $region65
    $region64: #{tpu_custom_call.1} parent=1 // pred_region
      %134 = dma.done [#allocation16], 16
    $region65: #{tpu_custom_call.1} parent=1 // pred_fallthru
      _
    %p136 = scmp.eq.s32.totalorder 0, 0
    // Predicated region
    $region66: #{tpu_custom_call.1} parent=1 // pred_check
      %p137 = pneg %p136
    $region67: #{tpu_custom_call.1} parent=1 // pred_check_branch
      %139 = sbr.rel (%p137) target = $region69
    $region68: #{tpu_custom_call.1} parent=1 // pred_region
      %140 = vst [vmem:[#allocation2] sm:$0xff] 0.0
      %141 = vst [vmem:[#allocation2 + $0x8] sm:$0xff] 0.0
      %142 = vst [vmem:[#allocation2 + $0x10] sm:$0xff] 0.0
      %143 = vst [vmem:[#allocation2 + $0x18] sm:$0xff] 0.0
      %144 = vst [vmem:[#allocation2 + $0x20] sm:$0xff] 0.0
      %145 = vst [vmem:[#allocation2 + $0x28] sm:$0xff] 0.0
      %146 = vst [vmem:[#allocation2 + $0x30] sm:$0xff] 0.0
      %147 = vst [vmem:[#allocation2 + $0x38] sm:$0xff] 0.0
      %148 = vst [vmem:[#allocation2 + $0x40] sm:$0xff] 0.0
      %149 = vst [vmem:[#allocation2 + $0x48] sm:$0xff] 0.0
      %150 = vst [vmem:[#allocation2 + $0x50] sm:$0xff] 0.0
      %151 = vst [vmem:[#allocation2 + $0x58] sm:$0xff] 0.0
      %152 = vst [vmem:[#allocation2 + $0x60] sm:$0xff] 0.0
      %153 = vst [vmem:[#allocation2 + $0x68] sm:$0xff] 0.0
      %154 = vst [vmem:[#allocation2 + $0x70] sm:$0xff] 0.0
      %155 = vst [vmem:[#allocation2 + $0x78] sm:$0xff] 0.0
      %156 = vst [vmem:[#allocation2 + $0x80] sm:$0xff] 0.0
      %157 = vst [vmem:[#allocation2 + $0x88] sm:$0xff] 0.0
      %158 = vst [vmem:[#allocation2 + $0x90] sm:$0xff] 0.0
      %159 = vst [vmem:[#allocation2 + $0x98] sm:$0xff] 0.0
      %160 = vst [vmem:[#allocation2 + $0xa0] sm:$0xff] 0.0
      %161 = vst [vmem:[#allocation2 + $0xa8] sm:$0xff] 0.0
      %162 = vst [vmem:[#allocation2 + $0xb0] sm:$0xff] 0.0
      %163 = vst [vmem:[#allocation2 + $0xb8] sm:$0xff] 0.0
      %164 = vst [vmem:[#allocation2 + $0xc0] sm:$0xff] 0.0
      %165 = vst [vmem:[#allocation2 + $0xc8] sm:$0xff] 0.0
      %166 = vst [vmem:[#allocation2 + $0xd0] sm:$0xff] 0.0
      %167 = vst [vmem:[#allocation2 + $0xd8] sm:$0xff] 0.0
      %168 = vst [vmem:[#allocation2 + $0xe0] sm:$0xff] 0.0
      %169 = vst [vmem:[#allocation2 + $0xe8] sm:$0xff] 0.0
      %170 = vst [vmem:[#allocation2 + $0xf0] sm:$0xff] 0.0
      %171 = vst [vmem:[#allocation2 + $0xf8] sm:$0xff] 0.0
    $region69: #{tpu_custom_call.1} parent=1 // pred_fallthru
      _
    %v172 = vld [vmem:[#allocation2] sm:$0xff]
    %v173 = vld [vmem:[#allocation2 + $0x8] sm:$0xff]
    %v174 = vld [vmem:[#allocation2 + $0x10] sm:$0xff]
    %v175 = vld [vmem:[#allocation2 + $0x18] sm:$0xff]
    %v176 = vld [vmem:[#allocation2 + $0x20] sm:$0xff]
    %v177 = vld [vmem:[#allocation2 + $0x28] sm:$0xff]
    %v178 = vld [vmem:[#allocation2 + $0x30] sm:$0xff]
    %v179 = vld [vmem:[#allocation2 + $0x38] sm:$0xff]
    %v180 = vld [vmem:[#allocation2 + $0x40] sm:$0xff]
    %v181 = vld [vmem:[#allocation2 + $0x48] sm:$0xff]
    %v182 = vld [vmem:[#allocation2 + $0x50] sm:$0xff]
    %v183 = vld [vmem:[#allocation2 + $0x58] sm:$0xff]
    %v184 = vld [vmem:[#allocation2 + $0x60] sm:$0xff]
    %v185 = vld [vmem:[#allocation2 + $0x68] sm:$0xff]
    %v186 = vld [vmem:[#allocation2 + $0x70] sm:$0xff]
    %v187 = vld [vmem:[#allocation2 + $0x78] sm:$0xff]
    %v188 = vld [vmem:[#allocation2 + $0x80] sm:$0xff]
    %v189 = vld [vmem:[#allocation2 + $0x88] sm:$0xff]
    %v190 = vld [vmem:[#allocation2 + $0x90] sm:$0xff]
    %v191 = vld [vmem:[#allocation2 + $0x98] sm:$0xff]
    %v192 = vld [vmem:[#allocation2 + $0xa0] sm:$0xff]
    %v193 = vld [vmem:[#allocation2 + $0xa8] sm:$0xff]
    %v194 = vld [vmem:[#allocation2 + $0xb0] sm:$0xff]
    %v195 = vld [vmem:[#allocation2 + $0xb8] sm:$0xff]
    %v196 = vld [vmem:[#allocation2 + $0xc0] sm:$0xff]
    %v197 = vld [vmem:[#allocation2 + $0xc8] sm:$0xff]
    %v198 = vld [vmem:[#allocation2 + $0xd0] sm:$0xff]
    %v199 = vld [vmem:[#allocation2 + $0xd8] sm:$0xff]
    %v200 = vld [vmem:[#allocation2 + $0xe0] sm:$0xff]
    %v201 = vld [vmem:[#allocation2 + $0xe8] sm:$0xff]
    %v202 = vld [vmem:[#allocation2 + $0xf0] sm:$0xff]
    %v203 = vld [vmem:[#allocation2 + $0xf8] sm:$0xff]
    %v204 = vld [vmem:[#allocation3] sm:$0xff]
    %v205 = vld [vmem:[#allocation3 + $0x8] sm:$0xff]
    %v206 = vld [vmem:[#allocation3 + $0x10] sm:$0xff]
    %v207 = vld [vmem:[#allocation3 + $0x18] sm:$0xff]
    %v208 = vld [vmem:[#allocation3 + $0x20] sm:$0xff]
    %v209 = vld [vmem:[#allocation3 + $0x28] sm:$0xff]
    %v210 = vld [vmem:[#allocation3 + $0x30] sm:$0xff]
    %v211 = vld [vmem:[#allocation3 + $0x38] sm:$0xff]
    %v212 = vld [vmem:[#allocation3 + $0x40] sm:$0xff]
    %v213 = vld [vmem:[#allocation3 + $0x48] sm:$0xff]
    %v214 = vld [vmem:[#allocation3 + $0x50] sm:$0xff]
    %v215 = vld [vmem:[#allocation3 + $0x58] sm:$0xff]
    %v216 = vld [vmem:[#allocation3 + $0x60] sm:$0xff]
    %v217 = vld [vmem:[#allocation3 + $0x68] sm:$0xff]
    %v218 = vld [vmem:[#allocation3 + $0x70] sm:$0xff]
    %v219 = vld [vmem:[#allocation3 + $0x78] sm:$0xff]
    %v220 = vld [vmem:[#allocation3 + $0x80] sm:$0xff]
    %v221 = vld [vmem:[#allocation3 + $0x88] sm:$0xff]
    %v222 = vld [vmem:[#allocation3 + $0x90] sm:$0xff]
    %v223 = vld [vmem:[#allocation3 + $0x98] sm:$0xff]
    %v224 = vld [vmem:[#allocation3 + $0xa0] sm:$0xff]
    %v225 = vld [vmem:[#allocation3 + $0xa8] sm:$0xff]
    %v226 = vld [vmem:[#allocation3 + $0xb0] sm:$0xff]
    %v227 = vld [vmem:[#allocation3 + $0xb8] sm:$0xff]
    %v228 = vld [vmem:[#allocation3 + $0xc0] sm:$0xff]
    %v229 = vld [vmem:[#allocation3 + $0xc8] sm:$0xff]
    %v230 = vld [vmem:[#allocation3 + $0xd0] sm:$0xff]
    %v231 = vld [vmem:[#allocation3 + $0xd8] sm:$0xff]
    %v232 = vld [vmem:[#allocation3 + $0xe0] sm:$0xff]
    %v233 = vld [vmem:[#allocation3 + $0xe8] sm:$0xff]
    %v234 = vld [vmem:[#allocation3 + $0xf0] sm:$0xff]
    %v235 = vld [vmem:[#allocation3 + $0xf8] sm:$0xff]
    %v236 = vld [vmem:[#allocation6] sm:$0xf]
    %v237 = vld [vmem:[#allocation6 + $0x4] sm:$0xf]
    %v238 = vld [vmem:[#allocation6 + $0x8] sm:$0xf]
    %v239 = vld [vmem:[#allocation6 + $0xc] sm:$0xf]
    %v240 = vld [vmem:[#allocation6 + $0x10] sm:$0xf]
    %v241 = vld [vmem:[#allocation6 + $0x14] sm:$0xf]
    %v242 = vld [vmem:[#allocation6 + $0x18] sm:$0xf]
    %v243 = vld [vmem:[#allocation6 + $0x1c] sm:$0xf]
    %v244 = vld [vmem:[#allocation6 + $0x20] sm:$0xf]
    %v245 = vld [vmem:[#allocation6 + $0x24] sm:$0xf]
    %v246 = vld [vmem:[#allocation6 + $0x28] sm:$0xf]
    %v247 = vld [vmem:[#allocation6 + $0x2c] sm:$0xf]
    %v248 = vld [vmem:[#allocation6 + $0x30] sm:$0xf]
    %v249 = vld [vmem:[#allocation6 + $0x34] sm:$0xf]
    %v250 = vld [vmem:[#allocation6 + $0x38] sm:$0xf]
    %v251 = vld [vmem:[#allocation6 + $0x3c] sm:$0xf]
    %v252 = vld [vmem:[#allocation6 + $0x40] sm:$0xf]
    %v253 = vld [vmem:[#allocation6 + $0x44] sm:$0xf]
    %v254 = vld [vmem:[#allocation6 + $0x48] sm:$0xf]
    %v255 = vld [vmem:[#allocation6 + $0x4c] sm:$0xf]
    %v256 = vld [vmem:[#allocation6 + $0x50] sm:$0xf]
    %v257 = vld [vmem:[#allocation6 + $0x54] sm:$0xf]
    %v258 = vld [vmem:[#allocation6 + $0x58] sm:$0xf]
    %v259 = vld [vmem:[#allocation6 + $0x5c] sm:$0xf]
    %v260 = vld [vmem:[#allocation6 + $0x60] sm:$0xf]
    %v261 = vld [vmem:[#allocation6 + $0x64] sm:$0xf]
    %v262 = vld [vmem:[#allocation6 + $0x68] sm:$0xf]
    %v263 = vld [vmem:[#allocation6 + $0x6c] sm:$0xf]
    %v264 = vld [vmem:[#allocation6 + $0x70] sm:$0xf]
    %v265 = vld [vmem:[#allocation6 + $0x74] sm:$0xf]
    %v266 = vld [vmem:[#allocation6 + $0x78] sm:$0xf]
    %v267 = vld [vmem:[#allocation6 + $0x7c] sm:$0xf]
    %v300 = vunpack.c.l.b16 %v204
    %v301 = vunpack.c.h.b16 %v204
    %v302 = vunpack.c.l.b16 %v205
    %v303 = vunpack.c.h.b16 %v205
    %v304 = vunpack.c.l.b16 %v206
    %v305 = vunpack.c.h.b16 %v206
    %v306 = vunpack.c.l.b16 %v207
    %v307 = vunpack.c.h.b16 %v207
    %v308 = vunpack.c.l.b16 %v208
    %v309 = vunpack.c.h.b16 %v208
    %v310 = vunpack.c.l.b16 %v209
    %v311 = vunpack.c.h.b16 %v209
    %v312 = vunpack.c.l.b16 %v210
    %v313 = vunpack.c.h.b16 %v210
    %v314 = vunpack.c.l.b16 %v211
    %v315 = vunpack.c.h.b16 %v211
    %v316 = vunpack.c.l.b16 %v212
    %v317 = vunpack.c.h.b16 %v212
    %v318 = vunpack.c.l.b16 %v213
    %v319 = vunpack.c.h.b16 %v213
    %v320 = vunpack.c.l.b16 %v214
    %v321 = vunpack.c.h.b16 %v214
    %v322 = vunpack.c.l.b16 %v215
    %v323 = vunpack.c.h.b16 %v215
    %v324 = vunpack.c.l.b16 %v216
    %v325 = vunpack.c.h.b16 %v216
    %v326 = vunpack.c.l.b16 %v217
    %v327 = vunpack.c.h.b16 %v217
    %v328 = vunpack.c.l.b16 %v218
    %v329 = vunpack.c.h.b16 %v218
    %v330 = vunpack.c.l.b16 %v219
    %v331 = vunpack.c.h.b16 %v219
    %v332 = vunpack.c.l.b16 %v220
    %v333 = vunpack.c.h.b16 %v220
    %v334 = vunpack.c.l.b16 %v221
    %v335 = vunpack.c.h.b16 %v221
    %v336 = vunpack.c.l.b16 %v222
    %v337 = vunpack.c.h.b16 %v222
    %v338 = vunpack.c.l.b16 %v223
    %v339 = vunpack.c.h.b16 %v223
    %v340 = vunpack.c.l.b16 %v224
    %v341 = vunpack.c.h.b16 %v224
    %v342 = vunpack.c.l.b16 %v225
    %v343 = vunpack.c.h.b16 %v225
    %v344 = vunpack.c.l.b16 %v226
    %v345 = vunpack.c.h.b16 %v226
    %v346 = vunpack.c.l.b16 %v227
    %v347 = vunpack.c.h.b16 %v227
    %v348 = vunpack.c.l.b16 %v228
    %v349 = vunpack.c.h.b16 %v228
    %v350 = vunpack.c.l.b16 %v229
    %v351 = vunpack.c.h.b16 %v229
    %v352 = vunpack.c.l.b16 %v230
    %v353 = vunpack.c.h.b16 %v230
    %v354 = vunpack.c.l.b16 %v231
    %v355 = vunpack.c.h.b16 %v231
    %v356 = vunpack.c.l.b16 %v232
    %v357 = vunpack.c.h.b16 %v232
    %v358 = vunpack.c.l.b16 %v233
    %v359 = vunpack.c.h.b16 %v233
    %v360 = vunpack.c.l.b16 %v234
    %v361 = vunpack.c.h.b16 %v234
    %v362 = vunpack.c.l.b16 %v235
    %v363 = vunpack.c.h.b16 %v235
    %v364 = vpack.c.b16 %v302, %v300
    %v365 = vpack.c.b16 %v303, %v301
    %v366 = vpack.c.b16 %v306, %v304
    %v367 = vpack.c.b16 %v307, %v305
    %v368 = vpack.c.b16 %v310, %v308
    %v369 = vpack.c.b16 %v311, %v309
    %v370 = vpack.c.b16 %v314, %v312
    %v371 = vpack.c.b16 %v315, %v313
    %v372 = vpack.c.b16 %v318, %v316
    %v373 = vpack.c.b16 %v319, %v317
    %v374 = vpack.c.b16 %v322, %v320
    %v375 = vpack.c.b16 %v323, %v321
    %v376 = vpack.c.b16 %v326, %v324
    %v377 = vpack.c.b16 %v327, %v325
    %v378 = vpack.c.b16 %v330, %v328
    %v379 = vpack.c.b16 %v331, %v329
    %v380 = vpack.c.b16 %v334, %v332
    %v381 = vpack.c.b16 %v335, %v333
    %v382 = vpack.c.b16 %v338, %v336
    %v383 = vpack.c.b16 %v339, %v337
    %v384 = vpack.c.b16 %v342, %v340
    %v385 = vpack.c.b16 %v343, %v341
    %v386 = vpack.c.b16 %v346, %v344
    %v387 = vpack.c.b16 %v347, %v345
    %v388 = vpack.c.b16 %v350, %v348
    %v389 = vpack.c.b16 %v351, %v349
    %v390 = vpack.c.b16 %v354, %v352
    %v391 = vpack.c.b16 %v355, %v353
    %v392 = vpack.c.b16 %v358, %v356
    %v393 = vpack.c.b16 %v359, %v357
    %v394 = vpack.c.b16 %v362, %v360
    %v395 = vpack.c.b16 %v363, %v361
    %v460 = vunpack.c.l.b16 %v236
    %v461 = vunpack.c.l.b16 %v237
    %v462 = vunpack.c.l.b16 %v238
    %v463 = vunpack.c.l.b16 %v239
    %v464 = vunpack.c.l.b16 %v240
    %v465 = vunpack.c.l.b16 %v241
    %v466 = vunpack.c.l.b16 %v242
    %v467 = vunpack.c.l.b16 %v243
    %v468 = vunpack.c.l.b16 %v244
    %v469 = vunpack.c.l.b16 %v245
    %v470 = vunpack.c.l.b16 %v246
    %v471 = vunpack.c.l.b16 %v247
    %v472 = vunpack.c.l.b16 %v248
    %v473 = vunpack.c.l.b16 %v249
    %v474 = vunpack.c.l.b16 %v250
    %v475 = vunpack.c.l.b16 %v251
    %v476 = vunpack.c.l.b16 %v252
    %v477 = vunpack.c.l.b16 %v253
    %v478 = vunpack.c.l.b16 %v254
    %v479 = vunpack.c.l.b16 %v255
    %v480 = vunpack.c.l.b16 %v256
    %v481 = vunpack.c.l.b16 %v257
    %v482 = vunpack.c.l.b16 %v258
    %v483 = vunpack.c.l.b16 %v259
    %v484 = vunpack.c.l.b16 %v260
    %v485 = vunpack.c.l.b16 %v261
    %v486 = vunpack.c.l.b16 %v262
    %v487 = vunpack.c.l.b16 %v263
    %v488 = vunpack.c.l.b16 %v264
    %v489 = vunpack.c.l.b16 %v265
    %v490 = vunpack.c.l.b16 %v266
    %v491 = vunpack.c.l.b16 %v267
    %v492 = vpack.c.b16 %v461, %v460
    %v493 = vpack.c.b16 %v463, %v462
    %v494 = vpack.c.b16 %v465, %v464
    %v495 = vpack.c.b16 %v467, %v466
    %v496 = vpack.c.b16 %v469, %v468
    %v497 = vpack.c.b16 %v471, %v470
    %v498 = vpack.c.b16 %v473, %v472
    %v499 = vpack.c.b16 %v475, %v474
    %v500 = vpack.c.b16 %v477, %v476
    %v501 = vpack.c.b16 %v479, %v478
    %v502 = vpack.c.b16 %v481, %v480
    %v503 = vpack.c.b16 %v483, %v482
    %v504 = vpack.c.b16 %v485, %v484
    %v505 = vpack.c.b16 %v487, %v486
    %v506 = vpack.c.b16 %v489, %v488
    %v507 = vpack.c.b16 %v491, %v490
    %524 = vmatprep.subr.bf16.mxu0 0
    %525 = vmatpush1.bf16.msra.mxu0 %v492
    %526 = vmatprep.subr.bf16.mxu0 0
    %527 = vmatpush1.bf16.msra.mxu0 %v493
    %528 = vmatprep.subr.bf16.mxu0 0
    %529 = vmatpush1.bf16.msra.mxu0 %v494
    %530 = vmatprep.subr.bf16.mxu0 0
    %531 = vmatpush1.bf16.msra.mxu0 %v495
    %532 = vmatprep.subr.bf16.mxu0 0
    %533 = vmatpush1.bf16.msra.mxu0 %v496
    %534 = vmatprep.subr.bf16.mxu0 0
    %535 = vmatpush1.bf16.msra.mxu0 %v497
    %536 = vmatprep.subr.bf16.mxu0 0
    %537 = vmatpush1.bf16.msra.mxu0 %v498
    %538 = vmatprep.subr.bf16.mxu0 0
    %539 = vmatpush1.bf16.msra.mxu0 %v499
    %540 = vmatprep.subr.bf16.mxu0 0
    %541 = vmatpush1.bf16.msra.mxu0 %v500
    %542 = vmatprep.subr.bf16.mxu0 0
    %543 = vmatpush1.bf16.msra.mxu0 %v501
    %544 = vmatprep.subr.bf16.mxu0 0
    %545 = vmatpush1.bf16.msra.mxu0 %v502
    %546 = vmatprep.subr.bf16.mxu0 0
    %547 = vmatpush1.bf16.msra.mxu0 %v503
    %548 = vmatprep.subr.bf16.mxu0 0
    %549 = vmatpush1.bf16.msra.mxu0 %v504
    %550 = vmatprep.subr.bf16.mxu0 0
    %551 = vmatpush1.bf16.msra.mxu0 %v505
    %552 = vmatprep.subr.bf16.mxu0 0
    %553 = vmatpush1.bf16.msra.mxu0 %v506
    %554 = vmatprep.subr.bf16.mxu0 0
    %555 = vmatpush1.bf16.msra.mxu0 %v507
    %556 = vmatprep.mubr.bf16.mxu0 %v365
    %557 = vmatmul.mubr.bf16.gmra.mrb[0].mxu0 %v364
    %v558 = vpop.f32.mrb[0].mxu0
    %v559 = vadd.f32 0.0, %v558
    %v560 = vpop.f32.mrb[0].mxu0
    %v561 = vpop.f32.mrb[0].mxu0
    %v562 = vadd.f32 0.0, %v561
    %v563 = vpop.f32.mrb[0].mxu0
    %564 = vmatprep.mubr.bf16.mxu0 %v367
    %565 = vmatmul.mubr.bf16.gmra.mrb[0].mxu0 %v366
    %v566 = vpop.f32.mrb[0].mxu0
    %v567 = vadd.f32 0.0, %v566
    %v568 = vpop.f32.mrb[0].mxu0
    %v569 = vpop.f32.mrb[0].mxu0
    %v570 = vadd.f32 0.0, %v569
    %v571 = vpop.f32.mrb[0].mxu0
    %572 = vmatprep.mubr.bf16.mxu0 %v369
    %573 = vmatmul.mubr.bf16.gmra.mrb[0].mxu0 %v368
    %v574 = vpop.f32.mrb[0].mxu0
    %v575 = vadd.f32 0.0, %v574
    %v576 = vpop.f32.mrb[0].mxu0
    %v577 = vpop.f32.mrb[0].mxu0
    %v578 = vadd.f32 0.0, %v577
    %v579 = vpop.f32.mrb[0].mxu0
    %580 = vmatprep.mubr.bf16.mxu0 %v371
    %581 = vmatmul.mubr.bf16.gmra.mrb[0].mxu0 %v370
    %v582 = vpop.f32.mrb[0].mxu0
    %v583 = vadd.f32 0.0, %v582
    %v584 = vpop.f32.mrb[0].mxu0
    %v585 = vpop.f32.mrb[0].mxu0
    %v586 = vadd.f32 0.0, %v585
    %v587 = vpop.f32.mrb[0].mxu0
    %588 = vmatprep.mubr.bf16.mxu0 %v373
    %589 = vmatmul.mubr.bf16.gmra.mrb[0].mxu0 %v372
    %v590 = vpop.f32.mrb[0].mxu0
    %v591 = vadd.f32 0.0, %v590
    %v592 = vpop.f32.mrb[0].mxu0
    %v593 = vpop.f32.mrb[0].mxu0
    %v594 = vadd.f32 0.0, %v593
    %v595 = vpop.f32.mrb[0].mxu0
    %596 = vmatprep.mubr.bf16.mxu0 %v375
    %597 = vmatmul.mubr.bf16.gmra.mrb[0].mxu0 %v374
    %v598 = vpop.f32.mrb[0].mxu0
    %v599 = vadd.f32 0.0, %v598
    %v600 = vpop.f32.mrb[0].mxu0
    %v601 = vpop.f32.mrb[0].mxu0
    %v602 = vadd.f32 0.0, %v601
    %v603 = vpop.f32.mrb[0].mxu0
    %604 = vmatprep.mubr.bf16.mxu0 %v377
    %605 = vmatmul.mubr.bf16.gmra.mrb[0].mxu0 %v376
    %v606 = vpop.f32.mrb[0].mxu0
    %v607 = vadd.f32 0.0, %v606
    %v608 = vpop.f32.mrb[0].mxu0
    %v609 = vpop.f32.mrb[0].mxu0
    %v610 = vadd.f32 0.0, %v609
    %v611 = vpop.f32.mrb[0].mxu0
    %612 = vmatprep.mubr.bf16.mxu0 %v379
    %613 = vmatmul.mubr.bf16.gmra.mrb[0].mxu0 %v378
    %v614 = vpop.f32.mrb[0].mxu0
    %v615 = vadd.f32 0.0, %v614
    %v616 = vpop.f32.mrb[0].mxu0
    %v617 = vpop.f32.mrb[0].mxu0
    %v618 = vadd.f32 0.0, %v617
    %v619 = vpop.f32.mrb[0].mxu0
    %620 = vmatprep.mubr.bf16.mxu0 %v381
    %621 = vmatmul.mubr.bf16.gmra.mrb[0].mxu0 %v380
    %v622 = vpop.f32.mrb[0].mxu0
    %v623 = vadd.f32 0.0, %v622
    %v624 = vpop.f32.mrb[0].mxu0
    %v625 = vpop.f32.mrb[0].mxu0
    %v626 = vadd.f32 0.0, %v625
    %v627 = vpop.f32.mrb[0].mxu0
    %628 = vmatprep.mubr.bf16.mxu0 %v383
    %629 = vmatmul.mubr.bf16.gmra.mrb[0].mxu0 %v382
    %v630 = vpop.f32.mrb[0].mxu0
    %v631 = vadd.f32 0.0, %v630
    %v632 = vpop.f32.mrb[0].mxu0
    %v633 = vpop.f32.mrb[0].mxu0
    %v634 = vadd.f32 0.0, %v633
    %v635 = vpop.f32.mrb[0].mxu0
    %636 = vmatprep.mubr.bf16.mxu0 %v385
    %637 = vmatmul.mubr.bf16.gmra.mrb[0].mxu0 %v384
    %v638 = vpop.f32.mrb[0].mxu0
    %v639 = vadd.f32 0.0, %v638
    %v640 = vpop.f32.mrb[0].mxu0
    %v641 = vpop.f32.mrb[0].mxu0
    %v642 = vadd.f32 0.0, %v641
    %v643 = vpop.f32.mrb[0].mxu0
    %644 = vmatprep.mubr.bf16.mxu0 %v387
    %645 = vmatmul.mubr.bf16.gmra.mrb[0].mxu0 %v386
    %v646 = vpop.f32.mrb[0].mxu0
    %v647 = vadd.f32 0.0, %v646
    %v648 = vpop.f32.mrb[0].mxu0
    %v649 = vpop.f32.mrb[0].mxu0
    %v650 = vadd.f32 0.0, %v649
    %v651 = vpop.f32.mrb[0].mxu0
    %652 = vmatprep.mubr.bf16.mxu0 %v389
    %653 = vmatmul.mubr.bf16.gmra.mrb[0].mxu0 %v388
    %v654 = vpop.f32.mrb[0].mxu0
    %v655 = vadd.f32 0.0, %v654
    %v656 = vpop.f32.mrb[0].mxu0
    %v657 = vpop.f32.mrb[0].mxu0
    %v658 = vadd.f32 0.0, %v657
    %v659 = vpop.f32.mrb[0].mxu0
    %660 = vmatprep.mubr.bf16.mxu0 %v391
    %661 = vmatmul.mubr.bf16.gmra.mrb[0].mxu0 %v390
    %v662 = vpop.f32.mrb[0].mxu0
    %v663 = vadd.f32 0.0, %v662
    %v664 = vpop.f32.mrb[0].mxu0
    %v665 = vpop.f32.mrb[0].mxu0
    %v666 = vadd.f32 0.0, %v665
    %v667 = vpop.f32.mrb[0].mxu0
    %668 = vmatprep.mubr.bf16.mxu0 %v393
    %669 = vmatmul.mubr.bf16.gmra.mrb[0].mxu0 %v392
    %v670 = vpop.f32.mrb[0].mxu0
    %v671 = vadd.f32 0.0, %v670
    %v672 = vpop.f32.mrb[0].mxu0
    %v673 = vpop.f32.mrb[0].mxu0
    %v674 = vadd.f32 0.0, %v673
    %v675 = vpop.f32.mrb[0].mxu0
    %676 = vmatprep.mubr.bf16.mxu0 %v395
    %677 = vmatmul.mubr.bf16.gmra.mrb[0].mxu0 %v394
    %v678 = vpop.f32.mrb[0].mxu0
    %v679 = vadd.f32 0.0, %v678
    %v680 = vpop.f32.mrb[0].mxu0
    %v681 = vpop.f32.mrb[0].mxu0
    %v682 = vadd.f32 0.0, %v681
    %v683 = vpop.f32.mrb[0].mxu0
    %684 = vdwg.mxu0
    %v685 = vadd.f32 %v172, %v559
    %v686 = vadd.f32 %v173, %v562
    %v687 = vadd.f32 %v174, %v567
    %v688 = vadd.f32 %v175, %v570
    %v689 = vadd.f32 %v176, %v575
    %v690 = vadd.f32 %v177, %v578
    %v691 = vadd.f32 %v178, %v583
    %v692 = vadd.f32 %v179, %v586
    %v693 = vadd.f32 %v180, %v591
    %v694 = vadd.f32 %v181, %v594
    %v695 = vadd.f32 %v182, %v599
    %v696 = vadd.f32 %v183, %v602
    %v697 = vadd.f32 %v184, %v607
    %v698 = vadd.f32 %v185, %v610
    %v699 = vadd.f32 %v186, %v615
    %v700 = vadd.f32 %v187, %v618
    %v701 = vadd.f32 %v188, %v623
    %v702 = vadd.f32 %v189, %v626
    %v703 = vadd.f32 %v190, %v631
    %v704 = vadd.f32 %v191, %v634
    %v705 = vadd.f32 %v192, %v639
    %v706 = vadd.f32 %v193, %v642
    %v707 = vadd.f32 %v194, %v647
    %v708 = vadd.f32 %v195, %v650
    %v709 = vadd.f32 %v196, %v655
    %v710 = vadd.f32 %v197, %v658
    %v711 = vadd.f32 %v198, %v663
    %v712 = vadd.f32 %v199, %v666
    %v713 = vadd.f32 %v200, %v671
    %v714 = vadd.f32 %v201, %v674
    %v715 = vadd.f32 %v202, %v679
    %v716 = vadd.f32 %v203, %v682
    %717 = vst [vmem:[#allocation2] sm:$0xff] %v685
    %718 = vst [vmem:[#allocation2 + $0x8] sm:$0xff] %v686
    %719 = vst [vmem:[#allocation2 + $0x10] sm:$0xff] %v687
    %720 = vst [vmem:[#allocation2 + $0x18] sm:$0xff] %v688
    %721 = vst [vmem:[#allocation2 + $0x20] sm:$0xff] %v689
    %722 = vst [vmem:[#allocation2 + $0x28] sm:$0xff] %v690
    %723 = vst [vmem:[#allocation2 + $0x30] sm:$0xff] %v691
    %724 = vst [vmem:[#allocation2 + $0x38] sm:$0xff] %v692
    %725 = vst [vmem:[#allocation2 + $0x40] sm:$0xff] %v693
    %726 = vst [vmem:[#allocation2 + $0x48] sm:$0xff] %v694
    %727 = vst [vmem:[#allocation2 + $0x50] sm:$0xff] %v695
    %728 = vst [vmem:[#allocation2 + $0x58] sm:$0xff] %v696
    %729 = vst [vmem:[#allocation2 + $0x60] sm:$0xff] %v697
    %730 = vst [vmem:[#allocation2 + $0x68] sm:$0xff] %v698
    %731 = vst [vmem:[#allocation2 + $0x70] sm:$0xff] %v699
    %732 = vst [vmem:[#allocation2 + $0x78] sm:$0xff] %v700
    %733 = vst [vmem:[#allocation2 + $0x80] sm:$0xff] %v701
    %734 = vst [vmem:[#allocation2 + $0x88] sm:$0xff] %v702
    %735 = vst [vmem:[#allocation2 + $0x90] sm:$0xff] %v703
    %736 = vst [vmem:[#allocation2 + $0x98] sm:$0xff] %v704
    %737 = vst [vmem:[#allocation2 + $0xa0] sm:$0xff] %v705
    %738 = vst [vmem:[#allocation2 + $0xa8] sm:$0xff] %v706
    %739 = vst [vmem:[#allocation2 + $0xb0] sm:$0xff] %v707
    %740 = vst [vmem:[#allocation2 + $0xb8] sm:$0xff] %v708
    %741 = vst [vmem:[#allocation2 + $0xc0] sm:$0xff] %v709
    %742 = vst [vmem:[#allocation2 + $0xc8] sm:$0xff] %v710
    %743 = vst [vmem:[#allocation2 + $0xd0] sm:$0xff] %v711
    %744 = vst [vmem:[#allocation2 + $0xd8] sm:$0xff] %v712
    %745 = vst [vmem:[#allocation2 + $0xe0] sm:$0xff] %v713
    %746 = vst [vmem:[#allocation2 + $0xe8] sm:$0xff] %v714
    %747 = vst [vmem:[#allocation2 + $0xf0] sm:$0xff] %v715
    %748 = vst [vmem:[#allocation2 + $0xf8] sm:$0xff] %v716
    // Predicated region
    $region70: #{tpu_custom_call.1} parent=1 // pred_check
      %p749 = pneg %p136
    $region71: #{tpu_custom_call.1} parent=1 // pred_check_branch
      %751 = sbr.rel (%p749) target = $region73
    $region72: #{tpu_custom_call.1} parent=1 // pred_region
      %v752 = vld [vmem:[#allocation8] sm:$0xf]
      %v753 = vld [vmem:[#allocation8 + $0x4] sm:$0xf]
      %v754 = vld [vmem:[#allocation8 + $0x8] sm:$0xf]
      %v755 = vld [vmem:[#allocation8 + $0xc] sm:$0xf]
      %v756 = vld [vmem:[#allocation8 + $0x10] sm:$0xf]
      %v757 = vld [vmem:[#allocation8 + $0x14] sm:$0xf]
      %v758 = vld [vmem:[#allocation8 + $0x18] sm:$0xf]
      %v759 = vld [vmem:[#allocation8 + $0x1c] sm:$0xf]
      %v760 = vld [vmem:[#allocation8 + $0x20] sm:$0xf]
      %v761 = vld [vmem:[#allocation8 + $0x24] sm:$0xf]
      %v762 = vld [vmem:[#allocation8 + $0x28] sm:$0xf]
      %v763 = vld [vmem:[#allocation8 + $0x2c] sm:$0xf]
      %v764 = vld [vmem:[#allocation8 + $0x30] sm:$0xf]
      %v765 = vld [vmem:[#allocation8 + $0x34] sm:$0xf]
      %v766 = vld [vmem:[#allocation8 + $0x38] sm:$0xf]
      %v767 = vld [vmem:[#allocation8 + $0x3c] sm:$0xf]
      %v768 = vld [vmem:[#allocation8 + $0x40] sm:$0xf]
      %v769 = vld [vmem:[#allocation8 + $0x44] sm:$0xf]
      %v770 = vld [vmem:[#allocation8 + $0x48] sm:$0xf]
      %v771 = vld [vmem:[#allocation8 + $0x4c] sm:$0xf]
      %v772 = vld [vmem:[#allocation8 + $0x50] sm:$0xf]
      %v773 = vld [vmem:[#allocation8 + $0x54] sm:$0xf]
      %v774 = vld [vmem:[#allocation8 + $0x58] sm:$0xf]
      %v775 = vld [vmem:[#allocation8 + $0x5c] sm:$0xf]
      %v776 = vld [vmem:[#allocation8 + $0x60] sm:$0xf]
      %v777 = vld [vmem:[#allocation8 + $0x64] sm:$0xf]
      %v778 = vld [vmem:[#allocation8 + $0x68] sm:$0xf]
      %v779 = vld [vmem:[#allocation8 + $0x6c] sm:$0xf]
      %v780 = vld [vmem:[#allocation8 + $0x70] sm:$0xf]
      %v781 = vld [vmem:[#allocation8 + $0x74] sm:$0xf]
      %v782 = vld [vmem:[#allocation8 + $0x78] sm:$0xf]
      %v783 = vld [vmem:[#allocation8 + $0x7c] sm:$0xf]
      %v784 = vld [vmem:[#allocation9] sm:$0xff]
      %v785 = vld [vmem:[#allocation9 + $0x8] sm:$0xff]
      %v786 = vld [vmem:[#allocation9 + $0x10] sm:$0xff]
      %v787 = vld [vmem:[#allocation9 + $0x18] sm:$0xff]
      %v788 = vld [vmem:[#allocation9 + $0x20] sm:$0xff]
      %v789 = vld [vmem:[#allocation9 + $0x28] sm:$0xff]
      %v790 = vld [vmem:[#allocation9 + $0x30] sm:$0xff]
      %v791 = vld [vmem:[#allocation9 + $0x38] sm:$0xff]
      %v792 = vld [vmem:[#allocation9 + $0x40] sm:$0xff]
      %v793 = vld [vmem:[#allocation9 + $0x48] sm:$0xff]
      %v794 = vld [vmem:[#allocation9 + $0x50] sm:$0xff]
      %v795 = vld [vmem:[#allocation9 + $0x58] sm:$0xff]
      %v796 = vld [vmem:[#allocation9 + $0x60] sm:$0xff]
      %v797 = vld [vmem:[#allocation9 + $0x68] sm:$0xff]
      %v798 = vld [vmem:[#allocation9 + $0x70] sm:$0xff]
      %v799 = vld [vmem:[#allocation9 + $0x78] sm:$0xff]
      %v800 = vld [vmem:[#allocation2] sm:$0xff]
      %v801 = vld [vmem:[#allocation2 + $0x8] sm:$0xff]
      %v802 = vld [vmem:[#allocation2 + $0x10] sm:$0xff]
      %v803 = vld [vmem:[#allocation2 + $0x18] sm:$0xff]
      %v804 = vld [vmem:[#allocation2 + $0x20] sm:$0xff]
      %v805 = vld [vmem:[#allocation2 + $0x28] sm:$0xff]
      %v806 = vld [vmem:[#allocation2 + $0x30] sm:$0xff]
      %v807 = vld [vmem:[#allocation2 + $0x38] sm:$0xff]
      %v808 = vld [vmem:[#allocation2 + $0x40] sm:$0xff]
      %v809 = vld [vmem:[#allocation2 + $0x48] sm:$0xff]
      %v810 = vld [vmem:[#allocation2 + $0x50] sm:$0xff]
      %v811 = vld [vmem:[#allocation2 + $0x58] sm:$0xff]
      %v812 = vld [vmem:[#allocation2 + $0x60] sm:$0xff]
      %v813 = vld [vmem:[#allocation2 + $0x68] sm:$0xff]
      %v814 = vld [vmem:[#allocation2 + $0x70] sm:$0xff]
      %v815 = vld [vmem:[#allocation2 + $0x78] sm:$0xff]
      %v816 = vld [vmem:[#allocation2 + $0x80] sm:$0xff]
      %v817 = vld [vmem:[#allocation2 + $0x88] sm:$0xff]
      %v818 = vld [vmem:[#allocation2 + $0x90] sm:$0xff]
      %v819 = vld [vmem:[#allocation2 + $0x98] sm:$0xff]
      %v820 = vld [vmem:[#allocation2 + $0xa0] sm:$0xff]
      %v821 = vld [vmem:[#allocation2 + $0xa8] sm:$0xff]
      %v822 = vld [vmem:[#allocation2 + $0xb0] sm:$0xff]
      %v823 = vld [vmem:[#allocation2 + $0xb8] sm:$0xff]
      %v824 = vld [vmem:[#allocation2 + $0xc0] sm:$0xff]
      %v825 = vld [vmem:[#allocation2 + $0xc8] sm:$0xff]
      %v826 = vld [vmem:[#allocation2 + $0xd0] sm:$0xff]
      %v827 = vld [vmem:[#allocation2 + $0xd8] sm:$0xff]
      %v828 = vld [vmem:[#allocation2 + $0xe0] sm:$0xff]
      %v829 = vld [vmem:[#allocation2 + $0xe8] sm:$0xff]
      %v830 = vld [vmem:[#allocation2 + $0xf0] sm:$0xff]
      %v831 = vld [vmem:[#allocation2 + $0xf8] sm:$0xff]
      %v832 = vpack.c.bf16 %v801, %v800
      %v833 = vpack.c.bf16 %v803, %v802
      %v834 = vpack.c.bf16 %v805, %v804
      %v835 = vpack.c.bf16 %v807, %v806
      %v836 = vpack.c.bf16 %v809, %v808
      %v837 = vpack.c.bf16 %v811, %v810
      %v838 = vpack.c.bf16 %v813, %v812
      %v839 = vpack.c.bf16 %v815, %v814
      %v840 = vpack.c.bf16 %v817, %v816
      %v841 = vpack.c.bf16 %v819, %v818
      %v842 = vpack.c.bf16 %v821, %v820
      %v843 = vpack.c.bf16 %v823, %v822
      %v844 = vpack.c.bf16 %v825, %v824
      %v845 = vpack.c.bf16 %v827, %v826
      %v846 = vpack.c.bf16 %v829, %v828
      %v847 = vpack.c.bf16 %v831, %v830
      %v848 = vld [vmem:[#allocation11] sm:$0xff]
      %v849 = vld [vmem:[#allocation11 + $0x8] sm:$0xff]
      %v850 = vld [vmem:[#allocation11 + $0x10] sm:$0xff]
      %v851 = vld [vmem:[#allocation11 + $0x18] sm:$0xff]
      %v852 = vld [vmem:[#allocation11 + $0x20] sm:$0xff]
      %v853 = vld [vmem:[#allocation11 + $0x28] sm:$0xff]
      %v854 = vld [vmem:[#allocation11 + $0x30] sm:$0xff]
      %v855 = vld [vmem:[#allocation11 + $0x38] sm:$0xff]
      %v856 = vld [vmem:[#allocation11 + $0x40] sm:$0xff]
      %v857 = vld [vmem:[#allocation11 + $0x48] sm:$0xff]
      %v858 = vld [vmem:[#allocation11 + $0x50] sm:$0xff]
      %v859 = vld [vmem:[#allocation11 + $0x58] sm:$0xff]
      %v860 = vld [vmem:[#allocation11 + $0x60] sm:$0xff]
      %v861 = vld [vmem:[#allocation11 + $0x68] sm:$0xff]
      %v862 = vld [vmem:[#allocation11 + $0x70] sm:$0xff]
      %v863 = vld [vmem:[#allocation11 + $0x78] sm:$0xff]
      %v880 = vunpack.c.l.b16 %v848
      %v881 = vunpack.c.h.b16 %v848
      %v882 = vunpack.c.l.b16 %v849
      %v883 = vunpack.c.h.b16 %v849
      %v884 = vunpack.c.l.b16 %v850
      %v885 = vunpack.c.h.b16 %v850
      %v886 = vunpack.c.l.b16 %v851
      %v887 = vunpack.c.h.b16 %v851
      %v888 = vunpack.c.l.b16 %v852
      %v889 = vunpack.c.h.b16 %v852
      %v890 = vunpack.c.l.b16 %v853
      %v891 = vunpack.c.h.b16 %v853
      %v892 = vunpack.c.l.b16 %v854
      %v893 = vunpack.c.h.b16 %v854
      %v894 = vunpack.c.l.b16 %v855
      %v895 = vunpack.c.h.b16 %v855
      %v896 = vunpack.c.l.b16 %v856
      %v897 = vunpack.c.h.b16 %v856
      %v898 = vunpack.c.l.b16 %v857
      %v899 = vunpack.c.h.b16 %v857
      %v900 = vunpack.c.l.b16 %v858
      %v901 = vunpack.c.h.b16 %v858
      %v902 = vunpack.c.l.b16 %v859
      %v903 = vunpack.c.h.b16 %v859
      %v904 = vunpack.c.l.b16 %v860
      %v905 = vunpack.c.h.b16 %v860
      %v906 = vunpack.c.l.b16 %v861
      %v907 = vunpack.c.h.b16 %v861
      %v908 = vunpack.c.l.b16 %v862
      %v909 = vunpack.c.h.b16 %v862
      %v910 = vunpack.c.l.b16 %v863
      %v911 = vunpack.c.h.b16 %v863
      %v912 = vpack.c.b16 %v882, %v880
      %v913 = vpack.c.b16 %v883, %v881
      %v914 = vpack.c.b16 %v886, %v884
      %v915 = vpack.c.b16 %v887, %v885
      %v916 = vpack.c.b16 %v890, %v888
      %v917 = vpack.c.b16 %v891, %v889
      %v918 = vpack.c.b16 %v894, %v892
      %v919 = vpack.c.b16 %v895, %v893
      %v920 = vpack.c.b16 %v898, %v896
      %v921 = vpack.c.b16 %v899, %v897
      %v922 = vpack.c.b16 %v902, %v900
      %v923 = vpack.c.b16 %v903, %v901
      %v924 = vpack.c.b16 %v906, %v904
      %v925 = vpack.c.b16 %v907, %v905
      %v926 = vpack.c.b16 %v910, %v908
      %v927 = vpack.c.b16 %v911, %v909
      %944 = vmatprep.subr.bf16.mxu0 %v913
      %945 = vmatpush1.bf16.msra.mxu0 %v912
      %946 = vmatprep.subr.bf16.mxu0 %v915
      %947 = vmatpush1.bf16.msra.mxu0 %v914
      %948 = vmatprep.subr.bf16.mxu0 %v917
      %949 = vmatpush1.bf16.msra.mxu0 %v916
      %950 = vmatprep.subr.bf16.mxu0 %v919
      %951 = vmatpush1.bf16.msra.mxu0 %v918
      %952 = vmatprep.subr.bf16.mxu0 %v921
      %953 = vmatpush1.bf16.msra.mxu0 %v920
      %954 = vmatprep.subr.bf16.mxu0 %v923
      %955 = vmatpush1.bf16.msra.mxu0 %v922
      %956 = vmatprep.subr.bf16.mxu0 %v925
      %957 = vmatpush1.bf16.msra.mxu0 %v924
      %958 = vmatprep.subr.bf16.mxu0 %v927
      %959 = vmatpush1.bf16.msra.mxu0 %v926
      %960 = vmatprep.subr.bf16.mxu0 0
      %961 = vmatpush1.bf16.msra.mxu0 0
      %962 = vmatprep.subr.bf16.mxu0 0
      %963 = vmatpush1.bf16.msra.mxu0 0
      %964 = vmatprep.subr.bf16.mxu0 0
      %965 = vmatpush1.bf16.msra.mxu0 0
      %966 = vmatprep.subr.bf16.mxu0 0
      %967 = vmatpush1.bf16.msra.mxu0 0
      %968 = vmatprep.subr.bf16.mxu0 0
      %969 = vmatpush1.bf16.msra.mxu0 0
      %970 = vmatprep.subr.bf16.mxu0 0
      %971 = vmatpush1.bf16.msra.mxu0 0
      %972 = vmatprep.subr.bf16.mxu0 0
      %973 = vmatpush1.bf16.msra.mxu0 0
      %974 = vmatprep.subr.bf16.mxu0 0
      %975 = vmatpush1.bf16.msra.mxu0 0
      %976 = vmatprep.mubr.bf16.mxu0 0
      %977 = vmatmul.mubr.bf16.gmra.mrb[0].mxu0 %v832
      %v978 = vpop.f32.mrb[0].mxu0
      %v979 = vadd.f32 0.0, %v978
      %v980 = vpop.f32.mrb[0].mxu0
      %v981 = vadd.f32 0.0, %v980
      %v982 = vpop.f32.mrb[0].mxu0
      %v983 = vadd.f32 0.0, %v982
      %v984 = vpop.f32.mrb[0].mxu0
      %v985 = vadd.f32 0.0, %v984
      %986 = vmatprep.mubr.bf16.mxu0 0
      %987 = vmatmul.mubr.bf16.gmra.mrb[0].mxu0 %v833
      %v988 = vpop.f32.mrb[0].mxu0
      %v989 = vadd.f32 0.0, %v988
      %v990 = vpop.f32.mrb[0].mxu0
      %v991 = vadd.f32 0.0, %v990
      %v992 = vpop.f32.mrb[0].mxu0
      %v993 = vadd.f32 0.0, %v992
      %v994 = vpop.f32.mrb[0].mxu0
      %v995 = vadd.f32 0.0, %v994
      %996 = vmatprep.mubr.bf16.mxu0 0
      %997 = vmatmul.mubr.bf16.gmra.mrb[0].mxu0 %v834
      %v998 = vpop.f32.mrb[0].mxu0
      %v999 = vadd.f32 0.0, %v998
      %v1000 = vpop.f32.mrb[0].mxu0
      %v1001 = vadd.f32 0.0, %v1000
      %v1002 = vpop.f32.mrb[0].mxu0
      %v1003 = vadd.f32 0.0, %v1002
      %v1004 = vpop.f32.mrb[0].mxu0
      %v1005 = vadd.f32 0.0, %v1004
      %1006 = vmatprep.mubr.bf16.mxu0 0
      %1007 = vmatmul.mubr.bf16.gmra.mrb[0].mxu0 %v835
      %v1008 = vpop.f32.mrb[0].mxu0
      %v1009 = vadd.f32 0.0, %v1008
      %v1010 = vpop.f32.mrb[0].mxu0
      %v1011 = vadd.f32 0.0, %v1010
      %v1012 = vpop.f32.mrb[0].mxu0
      %v1013 = vadd.f32 0.0, %v1012
      %v1014 = vpop.f32.mrb[0].mxu0
      %v1015 = vadd.f32 0.0, %v1014
      %1016 = vmatprep.mubr.bf16.mxu0 0
      %1017 = vmatmul.mubr.bf16.gmra.mrb[0].mxu0 %v836
      %v1018 = vpop.f32.mrb[0].mxu0
      %v1019 = vadd.f32 0.0, %v1018
      %v1020 = vpop.f32.mrb[0].mxu0
      %v1021 = vadd.f32 0.0, %v1020
      %v1022 = vpop.f32.mrb[0].mxu0
      %v1023 = vadd.f32 0.0, %v1022
      %v1024 = vpop.f32.mrb[0].mxu0
      %v1025 = vadd.f32 0.0, %v1024
      %1026 = vmatprep.mubr.bf16.mxu0 0
      %1027 = vmatmul.mubr.bf16.gmra.mrb[0].mxu0 %v837
      %v1028 = vpop.f32.mrb[0].mxu0
      %v1029 = vadd.f32 0.0, %v1028
      %v1030 = vpop.f32.mrb[0].mxu0
      %v1031 = vadd.f32 0.0, %v1030
      %v1032 = vpop.f32.mrb[0].mxu0
      %v1033 = vadd.f32 0.0, %v1032
      %v1034 = vpop.f32.mrb[0].mxu0
      %v1035 = vadd.f32 0.0, %v1034
      %1036 = vmatprep.mubr.bf16.mxu0 0
      %1037 = vmatmul.mubr.bf16.gmra.mrb[0].mxu0 %v838
      %v1038 = vpop.f32.mrb[0].mxu0
      %v1039 = vadd.f32 0.0, %v1038
      %v1040 = vpop.f32.mrb[0].mxu0
      %v1041 = vadd.f32 0.0, %v1040
      %v1042 = vpop.f32.mrb[0].mxu0
      %v1043 = vadd.f32 0.0, %v1042
      %v1044 = vpop.f32.mrb[0].mxu0
      %v1045 = vadd.f32 0.0, %v1044
      %1046 = vmatprep.mubr.bf16.mxu0 0
      %1047 = vmatmul.mubr.bf16.gmra.mrb[0].mxu0 %v839
      %v1048 = vpop.f32.mrb[0].mxu0
      %v1049 = vadd.f32 0.0, %v1048
      %v1050 = vpop.f32.mrb[0].mxu0
      %v1051 = vadd.f32 0.0, %v1050
      %v1052 = vpop.f32.mrb[0].mxu0
      %v1053 = vadd.f32 0.0, %v1052
      %v1054 = vpop.f32.mrb[0].mxu0
      %v1055 = vadd.f32 0.0, %v1054
      %1056 = vmatprep.mubr.bf16.mxu0 0
      %1057 = vmatmul.mubr.bf16.gmra.mrb[0].mxu0 %v840
      %v1058 = vpop.f32.mrb[0].mxu0
      %v1059 = vadd.f32 0.0, %v1058
      %v1060 = vpop.f32.mrb[0].mxu0
      %v1061 = vadd.f32 0.0, %v1060
      %v1062 = vpop.f32.mrb[0].mxu0
      %v1063 = vadd.f32 0.0, %v1062
      %v1064 = vpop.f32.mrb[0].mxu0
      %v1065 = vadd.f32 0.0, %v1064
      %1066 = vmatprep.mubr.bf16.mxu0 0
      %1067 = vmatmul.mubr.bf16.gmra.mrb[0].mxu0 %v841
      %v1068 = vpop.f32.mrb[0].mxu0
      %v1069 = vadd.f32 0.0, %v1068
      %v1070 = vpop.f32.mrb[0].mxu0
      %v1071 = vadd.f32 0.0, %v1070
      %v1072 = vpop.f32.mrb[0].mxu0
      %v1073 = vadd.f32 0.0, %v1072
      %v1074 = vpop.f32.mrb[0].mxu0
      %v1075 = vadd.f32 0.0, %v1074
      %1076 = vmatprep.mubr.bf16.mxu0 0
      %1077 = vmatmul.mubr.bf16.gmra.mrb[0].mxu0 %v842
      %v1078 = vpop.f32.mrb[0].mxu0
      %v1079 = vadd.f32 0.0, %v1078
      %v1080 = vpop.f32.mrb[0].mxu0
      %v1081 = vadd.f32 0.0, %v1080
      %v1082 = vpop.f32.mrb[0].mxu0
      %v1083 = vadd.f32 0.0, %v1082
      %v1084 = vpop.f32.mrb[0].mxu0
      %v1085 = vadd.f32 0.0, %v1084
      %1086 = vmatprep.mubr.bf16.mxu0 0
      %1087 = vmatmul.mubr.bf16.gmra.mrb[0].mxu0 %v843
      %v1088 = vpop.f32.mrb[0].mxu0
      %v1089 = vadd.f32 0.0, %v1088
      %v1090 = vpop.f32.mrb[0].mxu0
      %v1091 = vadd.f32 0.0, %v1090
      %v1092 = vpop.f32.mrb[0].mxu0
      %v1093 = vadd.f32 0.0, %v1092
      %v1094 = vpop.f32.mrb[0].mxu0
      %v1095 = vadd.f32 0.0, %v1094
      %1096 = vmatprep.mubr.bf16.mxu0 0
      %1097 = vmatmul.mubr.bf16.gmra.mrb[0].mxu0 %v844
      %v1098 = vpop.f32.mrb[0].mxu0
      %v1099 = vadd.f32 0.0, %v1098
      %v1100 = vpop.f32.mrb[0].mxu0
      %v1101 = vadd.f32 0.0, %v1100
      %v1102 = vpop.f32.mrb[0].mxu0
      %v1103 = vadd.f32 0.0, %v1102
      %v1104 = vpop.f32.mrb[0].mxu0
      %v1105 = vadd.f32 0.0, %v1104
      %1106 = vmatprep.mubr.bf16.mxu0 0
      %1107 = vmatmul.mubr.bf16.gmra.mrb[0].mxu0 %v845
      %v1108 = vpop.f32.mrb[0].mxu0
      %v1109 = vadd.f32 0.0, %v1108
      %v1110 = vpop.f32.mrb[0].mxu0
      %v1111 = vadd.f32 0.0, %v1110
      %v1112 = vpop.f32.mrb[0].mxu0
      %v1113 = vadd.f32 0.0, %v1112
      %v1114 = vpop.f32.mrb[0].mxu0
      %v1115 = vadd.f32 0.0, %v1114
      %1116 = vmatprep.mubr.bf16.mxu0 0
      %1117 = vmatmul.mubr.bf16.gmra.mrb[0].mxu0 %v846
      %v1118 = vpop.f32.mrb[0].mxu0
      %v1119 = vadd.f32 0.0, %v1118
      %v1120 = vpop.f32.mrb[0].mxu0
      %v1121 = vadd.f32 0.0, %v1120
      %v1122 = vpop.f32.mrb[0].mxu0
      %v1123 = vadd.f32 0.0, %v1122
      %v1124 = vpop.f32.mrb[0].mxu0
      %v1125 = vadd.f32 0.0, %v1124
      %1126 = vmatprep.mubr.bf16.mxu0 0
      %1127 = vmatmul.mubr.bf16.gmra.mrb[0].mxu0 %v847
      %v1128 = vpop.f32.mrb[0].mxu0
      %v1129 = vadd.f32 0.0, %v1128
      %v1130 = vpop.f32.mrb[0].mxu0
      %v1131 = vadd.f32 0.0, %v1130
      %v1132 = vpop.f32.mrb[0].mxu0
      %v1133 = vadd.f32 0.0, %v1132
      %v1134 = vpop.f32.mrb[0].mxu0
      %v1135 = vadd.f32 0.0, %v1134
      %1136 = vdwg.mxu0
      %v1169 = vunpack.c.l.b16 %v752
      %v1170 = vunpack.c.l.b16 %v753
      %v1171 = vunpack.c.l.b16 %v754
      %v1172 = vunpack.c.l.b16 %v755
      %v1173 = vunpack.c.l.b16 %v756
      %v1174 = vunpack.c.l.b16 %v757
      %v1175 = vunpack.c.l.b16 %v758
      %v1176 = vunpack.c.l.b16 %v759
      %v1177 = vunpack.c.l.b16 %v760
      %v1178 = vunpack.c.l.b16 %v761
      %v1179 = vunpack.c.l.b16 %v762
      %v1180 = vunpack.c.l.b16 %v763
      %v1181 = vunpack.c.l.b16 %v764
      %v1182 = vunpack.c.l.b16 %v765
      %v1183 = vunpack.c.l.b16 %v766
      %v1184 = vunpack.c.l.b16 %v767
      %v1185 = vunpack.c.l.b16 %v768
      %v1186 = vunpack.c.l.b16 %v769
      %v1187 = vunpack.c.l.b16 %v770
      %v1188 = vunpack.c.l.b16 %v771
      %v1189 = vunpack.c.l.b16 %v772
      %v1190 = vunpack.c.l.b16 %v773
      %v1191 = vunpack.c.l.b16 %v774
      %v1192 = vunpack.c.l.b16 %v775
      %v1193 = vunpack.c.l.b16 %v776
      %v1194 = vunpack.c.l.b16 %v777
      %v1195 = vunpack.c.l.b16 %v778
      %v1196 = vunpack.c.l.b16 %v779
      %v1197 = vunpack.c.l.b16 %v780
      %v1198 = vunpack.c.l.b16 %v781
      %v1199 = vunpack.c.l.b16 %v782
      %v1200 = vunpack.c.l.b16 %v783
      %v1201 = vpack.c.b16 %v1170, %v1169
      %v1202 = vpack.c.b16 %v1172, %v1171
      %v1203 = vpack.c.b16 %v1174, %v1173
      %v1204 = vpack.c.b16 %v1176, %v1175
      %v1205 = vpack.c.b16 %v1178, %v1177
      %v1206 = vpack.c.b16 %v1180, %v1179
      %v1207 = vpack.c.b16 %v1182, %v1181
      %v1208 = vpack.c.b16 %v1184, %v1183
      %v1209 = vpack.c.b16 %v1186, %v1185
      %v1210 = vpack.c.b16 %v1188, %v1187
      %v1211 = vpack.c.b16 %v1190, %v1189
      %v1212 = vpack.c.b16 %v1192, %v1191
      %v1213 = vpack.c.b16 %v1194, %v1193
      %v1214 = vpack.c.b16 %v1196, %v1195
      %v1215 = vpack.c.b16 %v1198, %v1197
      %v1216 = vpack.c.b16 %v1200, %v1199
      %v1249 = vunpack.c.l.b16 %v784
      %v1250 = vunpack.c.h.b16 %v784
      %v1251 = vunpack.c.l.b16 %v785
      %v1252 = vunpack.c.h.b16 %v785
      %v1253 = vunpack.c.l.b16 %v786
      %v1254 = vunpack.c.h.b16 %v786
      %v1255 = vunpack.c.l.b16 %v787
      %v1256 = vunpack.c.h.b16 %v787
      %v1257 = vunpack.c.l.b16 %v788
      %v1258 = vunpack.c.h.b16 %v788
      %v1259 = vunpack.c.l.b16 %v789
      %v1260 = vunpack.c.h.b16 %v789
      %v1261 = vunpack.c.l.b16 %v790
      %v1262 = vunpack.c.h.b16 %v790
      %v1263 = vunpack.c.l.b16 %v791
      %v1264 = vunpack.c.h.b16 %v791
      %v1265 = vunpack.c.l.b16 %v792
      %v1266 = vunpack.c.h.b16 %v792
      %v1267 = vunpack.c.l.b16 %v793
      %v1268 = vunpack.c.h.b16 %v793
      %v1269 = vunpack.c.l.b16 %v794
      %v1270 = vunpack.c.h.b16 %v794
      %v1271 = vunpack.c.l.b16 %v795
      %v1272 = vunpack.c.h.b16 %v795
      %v1273 = vunpack.c.l.b16 %v796
      %v1274 = vunpack.c.h.b16 %v796
      %v1275 = vunpack.c.l.b16 %v797
      %v1276 = vunpack.c.h.b16 %v797
      %v1277 = vunpack.c.l.b16 %v798
      %v1278 = vunpack.c.h.b16 %v798
      %v1279 = vunpack.c.l.b16 %v799
      %v1280 = vunpack.c.h.b16 %v799
      %v1281 = vpack.c.b16 %v1251, %v1249
      %v1282 = vpack.c.b16 %v1252, %v1250
      %v1283 = vpack.c.b16 %v1255, %v1253
      %v1284 = vpack.c.b16 %v1256, %v1254
      %v1285 = vpack.c.b16 %v1259, %v1257
      %v1286 = vpack.c.b16 %v1260, %v1258
      %v1287 = vpack.c.b16 %v1263, %v1261
      %v1288 = vpack.c.b16 %v1264, %v1262
      %v1289 = vpack.c.b16 %v1267, %v1265
      %v1290 = vpack.c.b16 %v1268, %v1266
      %v1291 = vpack.c.b16 %v1271, %v1269
      %v1292 = vpack.c.b16 %v1272, %v1270
      %v1293 = vpack.c.b16 %v1275, %v1273
      %v1294 = vpack.c.b16 %v1276, %v1274
      %v1295 = vpack.c.b16 %v1279, %v1277
      %v1296 = vpack.c.b16 %v1280, %v1278
      %1313 = vmatprep.subr.bf16.mxu0 %v1282
      %1314 = vmatpush1.bf16.msra.mxu0 %v1281
      %1315 = vmatprep.subr.bf16.mxu0 %v1284
      %1316 = vmatpush1.bf16.msra.mxu0 %v1283
      %1317 = vmatprep.subr.bf16.mxu0 %v1286
      %1318 = vmatpush1.bf16.msra.mxu0 %v1285
      %1319 = vmatprep.subr.bf16.mxu0 %v1288
      %1320 = vmatpush1.bf16.msra.mxu0 %v1287
      %1321 = vmatprep.subr.bf16.mxu0 %v1290
      %1322 = vmatpush1.bf16.msra.mxu0 %v1289
      %1323 = vmatprep.subr.bf16.mxu0 %v1292
      %1324 = vmatpush1.bf16.msra.mxu0 %v1291
      %1325 = vmatprep.subr.bf16.mxu0 %v1294
      %1326 = vmatpush1.bf16.msra.mxu0 %v1293
      %1327 = vmatprep.subr.bf16.mxu0 %v1296
      %1328 = vmatpush1.bf16.msra.mxu0 %v1295
      %1329 = vmatprep.subr.bf16.mxu0 0
      %1330 = vmatpush1.bf16.msra.mxu0 0
      %1331 = vmatprep.subr.bf16.mxu0 0
      %1332 = vmatpush1.bf16.msra.mxu0 0
      %1333 = vmatprep.subr.bf16.mxu0 0
      %1334 = vmatpush1.bf16.msra.mxu0 0
      %1335 = vmatprep.subr.bf16.mxu0 0
      %1336 = vmatpush1.bf16.msra.mxu0 0
      %1337 = vmatprep.subr.bf16.mxu0 0
      %1338 = vmatpush1.bf16.msra.mxu0 0
      %1339 = vmatprep.subr.bf16.mxu0 0
      %1340 = vmatpush1.bf16.msra.mxu0 0
      %1341 = vmatprep.subr.bf16.mxu0 0
      %1342 = vmatpush1.bf16.msra.mxu0 0
      %1343 = vmatprep.subr.bf16.mxu0 0
      %1344 = vmatpush1.bf16.msra.mxu0 0
      %1345 = vmatprep.mubr.bf16.mxu0 0
      %1346 = vmatmul.mubr.bf16.gmra.mrb[0].mxu0 %v1201
      %v1347 = vpop.f32.mrb[0].mxu0
      %v1348 = vadd.f32 %v979, %v1347
      %v1349 = vpop.f32.mrb[0].mxu0
      %v1350 = vadd.f32 %v981, %v1349
      %v1351 = vpop.f32.mrb[0].mxu0
      %v1352 = vadd.f32 %v983, %v1351
      %v1353 = vpop.f32.mrb[0].mxu0
      %v1354 = vadd.f32 %v985, %v1353
      %1355 = vmatprep.mubr.bf16.mxu0 0
      %1356 = vmatmul.mubr.bf16.gmra.mrb[0].mxu0 %v1202
      %v1357 = vpop.f32.mrb[0].mxu0
      %v1358 = vadd.f32 %v989, %v1357
      %v1359 = vpop.f32.mrb[0].mxu0
      %v1360 = vadd.f32 %v991, %v1359
      %v1361 = vpop.f32.mrb[0].mxu0
      %v1362 = vadd.f32 %v993, %v1361
      %v1363 = vpop.f32.mrb[0].mxu0
      %v1364 = vadd.f32 %v995, %v1363
      %1365 = vmatprep.mubr.bf16.mxu0 0
      %1366 = vmatmul.mubr.bf16.gmra.mrb[0].mxu0 %v1203
      %v1367 = vpop.f32.mrb[0].mxu0
      %v1368 = vadd.f32 %v999, %v1367
      %v1369 = vpop.f32.mrb[0].mxu0
      %v1370 = vadd.f32 %v1001, %v1369
      %v1371 = vpop.f32.mrb[0].mxu0
      %v1372 = vadd.f32 %v1003, %v1371
      %v1373 = vpop.f32.mrb[0].mxu0
      %v1374 = vadd.f32 %v1005, %v1373
      %1375 = vmatprep.mubr.bf16.mxu0 0
      %1376 = vmatmul.mubr.bf16.gmra.mrb[0].mxu0 %v1204
      %v1377 = vpop.f32.mrb[0].mxu0
      %v1378 = vadd.f32 %v1009, %v1377
      %v1379 = vpop.f32.mrb[0].mxu0
      %v1380 = vadd.f32 %v1011, %v1379
      %v1381 = vpop.f32.mrb[0].mxu0
      %v1382 = vadd.f32 %v1013, %v1381
      %v1383 = vpop.f32.mrb[0].mxu0
      %v1384 = vadd.f32 %v1015, %v1383
      %1385 = vmatprep.mubr.bf16.mxu0 0
      %1386 = vmatmul.mubr.bf16.gmra.mrb[0].mxu0 %v1205
      %v1387 = vpop.f32.mrb[0].mxu0
      %v1388 = vadd.f32 %v1019, %v1387
      %v1389 = vpop.f32.mrb[0].mxu0
      %v1390 = vadd.f32 %v1021, %v1389
      %v1391 = vpop.f32.mrb[0].mxu0
      %v1392 = vadd.f32 %v1023, %v1391
      %v1393 = vpop.f32.mrb[0].mxu0
      %v1394 = vadd.f32 %v1025, %v1393
      %1395 = vmatprep.mubr.bf16.mxu0 0
      %1396 = vmatmul.mubr.bf16.gmra.mrb[0].mxu0 %v1206
      %v1397 = vpop.f32.mrb[0].mxu0
      %v1398 = vadd.f32 %v1029, %v1397
      %v1399 = vpop.f32.mrb[0].mxu0
      %v1400 = vadd.f32 %v1031, %v1399
      %v1401 = vpop.f32.mrb[0].mxu0
      %v1402 = vadd.f32 %v1033, %v1401
      %v1403 = vpop.f32.mrb[0].mxu0
      %v1404 = vadd.f32 %v1035, %v1403
      %1405 = vmatprep.mubr.bf16.mxu0 0
      %1406 = vmatmul.mubr.bf16.gmra.mrb[0].mxu0 %v1207
      %v1407 = vpop.f32.mrb[0].mxu0
      %v1408 = vadd.f32 %v1039, %v1407
      %v1409 = vpop.f32.mrb[0].mxu0
      %v1410 = vadd.f32 %v1041, %v1409
      %v1411 = vpop.f32.mrb[0].mxu0
      %v1412 = vadd.f32 %v1043, %v1411
      %v1413 = vpop.f32.mrb[0].mxu0
      %v1414 = vadd.f32 %v1045, %v1413
      %1415 = vmatprep.mubr.bf16.mxu0 0
      %1416 = vmatmul.mubr.bf16.gmra.mrb[0].mxu0 %v1208
      %v1417 = vpop.f32.mrb[0].mxu0
      %v1418 = vadd.f32 %v1049, %v1417
      %v1419 = vpop.f32.mrb[0].mxu0
      %v1420 = vadd.f32 %v1051, %v1419
      %v1421 = vpop.f32.mrb[0].mxu0
      %v1422 = vadd.f32 %v1053, %v1421
      %v1423 = vpop.f32.mrb[0].mxu0
      %v1424 = vadd.f32 %v1055, %v1423
      %1425 = vmatprep.mubr.bf16.mxu0 0
      %1426 = vmatmul.mubr.bf16.gmra.mrb[0].mxu0 %v1209
      %v1427 = vpop.f32.mrb[0].mxu0
      %v1428 = vadd.f32 %v1059, %v1427
      %v1429 = vpop.f32.mrb[0].mxu0
      %v1430 = vadd.f32 %v1061, %v1429
      %v1431 = vpop.f32.mrb[0].mxu0
      %v1432 = vadd.f32 %v1063, %v1431
      %v1433 = vpop.f32.mrb[0].mxu0
      %v1434 = vadd.f32 %v1065, %v1433
      %1435 = vmatprep.mubr.bf16.mxu0 0
      %1436 = vmatmul.mubr.bf16.gmra.mrb[0].mxu0 %v1210
      %v1437 = vpop.f32.mrb[0].mxu0
      %v1438 = vadd.f32 %v1069, %v1437
      %v1439 = vpop.f32.mrb[0].mxu0
      %v1440 = vadd.f32 %v1071, %v1439
      %v1441 = vpop.f32.mrb[0].mxu0
      %v1442 = vadd.f32 %v1073, %v1441
      %v1443 = vpop.f32.mrb[0].mxu0
      %v1444 = vadd.f32 %v1075, %v1443
      %1445 = vmatprep.mubr.bf16.mxu0 0
      %1446 = vmatmul.mubr.bf16.gmra.mrb[0].mxu0 %v1211
      %v1447 = vpop.f32.mrb[0].mxu0
      %v1448 = vadd.f32 %v1079, %v1447
      %v1449 = vpop.f32.mrb[0].mxu0
      %v1450 = vadd.f32 %v1081, %v1449
      %v1451 = vpop.f32.mrb[0].mxu0
      %v1452 = vadd.f32 %v1083, %v1451
      %v1453 = vpop.f32.mrb[0].mxu0
      %v1454 = vadd.f32 %v1085, %v1453
      %1455 = vmatprep.mubr.bf16.mxu0 0
      %1456 = vmatmul.mubr.bf16.gmra.mrb[0].mxu0 %v1212
      %v1457 = vpop.f32.mrb[0].mxu0
      %v1458 = vadd.f32 %v1089, %v1457
      %v1459 = vpop.f32.mrb[0].mxu0
      %v1460 = vadd.f32 %v1091, %v1459
      %v1461 = vpop.f32.mrb[0].mxu0
      %v1462 = vadd.f32 %v1093, %v1461
      %v1463 = vpop.f32.mrb[0].mxu0
      %v1464 = vadd.f32 %v1095, %v1463
      %1465 = vmatprep.mubr.bf16.mxu0 0
      %1466 = vmatmul.mubr.bf16.gmra.mrb[0].mxu0 %v1213
      %v1467 = vpop.f32.mrb[0].mxu0
      %v1468 = vadd.f32 %v1099, %v1467
      %v1469 = vpop.f32.mrb[0].mxu0
      %v1470 = vadd.f32 %v1101, %v1469
      %v1471 = vpop.f32.mrb[0].mxu0
      %v1472 = vadd.f32 %v1103, %v1471
      %v1473 = vpop.f32.mrb[0].mxu0
      %v1474 = vadd.f32 %v1105, %v1473
      %1475 = vmatprep.mubr.bf16.mxu0 0
      %1476 = vmatmul.mubr.bf16.gmra.mrb[0].mxu0 %v1214
      %v1477 = vpop.f32.mrb[0].mxu0
      %v1478 = vadd.f32 %v1109, %v1477
      %v1479 = vpop.f32.mrb[0].mxu0
      %v1480 = vadd.f32 %v1111, %v1479
      %v1481 = vpop.f32.mrb[0].mxu0
      %v1482 = vadd.f32 %v1113, %v1481
      %v1483 = vpop.f32.mrb[0].mxu0
      %v1484 = vadd.f32 %v1115, %v1483
      %1485 = vmatprep.mubr.bf16.mxu0 0
      %1486 = vmatmul.mubr.bf16.gmra.mrb[0].mxu0 %v1215
      %v1487 = vpop.f32.mrb[0].mxu0
      %v1488 = vadd.f32 %v1119, %v1487
      %v1489 = vpop.f32.mrb[0].mxu0
      %v1490 = vadd.f32 %v1121, %v1489
      %v1491 = vpop.f32.mrb[0].mxu0
      %v1492 = vadd.f32 %v1123, %v1491
      %v1493 = vpop.f32.mrb[0].mxu0
      %v1494 = vadd.f32 %v1125, %v1493
      %1495 = vmatprep.mubr.bf16.mxu0 0
      %1496 = vmatmul.mubr.bf16.gmra.mrb[0].mxu0 %v1216
      %v1497 = vpop.f32.mrb[0].mxu0
      %v1498 = vadd.f32 %v1129, %v1497
      %v1499 = vpop.f32.mrb[0].mxu0
      %v1500 = vadd.f32 %v1131, %v1499
      %v1501 = vpop.f32.mrb[0].mxu0
      %v1502 = vadd.f32 %v1133, %v1501
      %v1503 = vpop.f32.mrb[0].mxu0
      %v1504 = vadd.f32 %v1135, %v1503
      %1505 = vdwg.mxu0
      %v1506 = vld [vmem:[#allocation12] sm:$0x3]
      %v1508 = vlaneseq
      %v1509 = vshrl.u32 %v1508, 7
      %v1510 = vsub.s32 0, %v1509
      %v1511 = vrot.slane %v1506, %v1510
      %v1512 = vlaneseq
      %v1513 = vshrl.u32 %v1512, 7
      %v1514 = vsub.s32 1, %v1513
      %v1515 = vrot.slane %v1506, %v1514
      %v1518 = vadd.f32 %v1348, %v1511
      %v1519 = vadd.f32 %v1350, %v1515
      %v1520 = vadd.f32 %v1352, %v1511
      %v1521 = vadd.f32 %v1354, %v1515
      %v1522 = vadd.f32 %v1358, %v1511
      %v1523 = vadd.f32 %v1360, %v1515
      %v1524 = vadd.f32 %v1362, %v1511
      %v1525 = vadd.f32 %v1364, %v1515
      %v1526 = vadd.f32 %v1368, %v1511
      %v1527 = vadd.f32 %v1370, %v1515
      %v1528 = vadd.f32 %v1372, %v1511
      %v1529 = vadd.f32 %v1374, %v1515
      %v1530 = vadd.f32 %v1378, %v1511
      %v1531 = vadd.f32 %v1380, %v1515
      %v1532 = vadd.f32 %v1382, %v1511
      %v1533 = vadd.f32 %v1384, %v1515
      %v1534 = vadd.f32 %v1388, %v1511
      %v1535 = vadd.f32 %v1390, %v1515
      %v1536 = vadd.f32 %v1392, %v1511
      %v1537 = vadd.f32 %v1394, %v1515
      %v1538 = vadd.f32 %v1398, %v1511
      %v1539 = vadd.f32 %v1400, %v1515
      %v1540 = vadd.f32 %v1402, %v1511
      %v1541 = vadd.f32 %v1404, %v1515
      %v1542 = vadd.f32 %v1408, %v1511
      %v1543 = vadd.f32 %v1410, %v1515
      %v1544 = vadd.f32 %v1412, %v1511
      %v1545 = vadd.f32 %v1414, %v1515
      %v1546 = vadd.f32 %v1418, %v1511
      %v1547 = vadd.f32 %v1420, %v1515
      %v1548 = vadd.f32 %v1422, %v1511
      %v1549 = vadd.f32 %v1424, %v1515
      %v1550 = vadd.f32 %v1428, %v1511
      %v1551 = vadd.f32 %v1430, %v1515
      %v1552 = vadd.f32 %v1432, %v1511
      %v1553 = vadd.f32 %v1434, %v1515
      %v1554 = vadd.f32 %v1438, %v1511
      %v1555 = vadd.f32 %v1440, %v1515
      %v1556 = vadd.f32 %v1442, %v1511
      %v1557 = vadd.f32 %v1444, %v1515
      %v1558 = vadd.f32 %v1448, %v1511
      %v1559 = vadd.f32 %v1450, %v1515
      %v1560 = vadd.f32 %v1452, %v1511
      %v1561 = vadd.f32 %v1454, %v1515
      %v1562 = vadd.f32 %v1458, %v1511
      %v1563 = vadd.f32 %v1460, %v1515
      %v1564 = vadd.f32 %v1462, %v1511
      %v1565 = vadd.f32 %v1464, %v1515
      %v1566 = vadd.f32 %v1468, %v1511
      %v1567 = vadd.f32 %v1470, %v1515
      %v1568 = vadd.f32 %v1472, %v1511
      %v1569 = vadd.f32 %v1474, %v1515
      %v1570 = vadd.f32 %v1478, %v1511
      %v1571 = vadd.f32 %v1480, %v1515
      %v1572 = vadd.f32 %v1482, %v1511
      %v1573 = vadd.f32 %v1484, %v1515
      %v1574 = vadd.f32 %v1488, %v1511
      %v1575 = vadd.f32 %v1490, %v1515
      %v1576 = vadd.f32 %v1492, %v1511
      %v1577 = vadd.f32 %v1494, %v1515
      %v1578 = vadd.f32 %v1498, %v1511
      %v1579 = vadd.f32 %v1500, %v1515
      %v1580 = vadd.f32 %v1502, %v1511
      %v1581 = vadd.f32 %v1504, %v1515
      %v1582 = vxor.u32 %v1518, 2147483648
      %v1583 = vxor.u32 %v1520, 2147483648
      %v1584 = vxor.u32 %v1522, 2147483648
      %v1585 = vxor.u32 %v1524, 2147483648
      %v1586 = vxor.u32 %v1526, 2147483648
      %v1587 = vxor.u32 %v1528, 2147483648
      %v1588 = vxor.u32 %v1530, 2147483648
      %v1589 = vxor.u32 %v1532, 2147483648
      %v1590 = vxor.u32 %v1534, 2147483648
      %v1591 = vxor.u32 %v1536, 2147483648
      %v1592 = vxor.u32 %v1538, 2147483648
      %v1593 = vxor.u32 %v1540, 2147483648
      %v1594 = vxor.u32 %v1542, 2147483648
      %v1595 = vxor.u32 %v1544, 2147483648
      %v1596 = vxor.u32 %v1546, 2147483648
      %v1597 = vxor.u32 %v1548, 2147483648
      %v1598 = vxor.u32 %v1550, 2147483648
      %v1599 = vxor.u32 %v1552, 2147483648
      %v1600 = vxor.u32 %v1554, 2147483648
      %v1601 = vxor.u32 %v1556, 2147483648
      %v1602 = vxor.u32 %v1558, 2147483648
      %v1603 = vxor.u32 %v1560, 2147483648
      %v1604 = vxor.u32 %v1562, 2147483648
      %v1605 = vxor.u32 %v1564, 2147483648
      %v1606 = vxor.u32 %v1566, 2147483648
      %v1607 = vxor.u32 %v1568, 2147483648
      %v1608 = vxor.u32 %v1570, 2147483648
      %v1609 = vxor.u32 %v1572, 2147483648
      %v1610 = vxor.u32 %v1574, 2147483648
      %v1611 = vxor.u32 %v1576, 2147483648
      %v1612 = vxor.u32 %v1578, 2147483648
      %v1613 = vxor.u32 %v1580, 2147483648
      %v1614 = vmul.f32 %v1582, 1.442695
      %v1615 = vpow.pop %v1614
      %v1616 = vmul.f32 %v1583, 1.442695
      %v1617 = vpow.pop %v1616
      %v1618 = vmul.f32 %v1584, 1.442695
      %v1619 = vpow.pop %v1618
      %v1620 = vmul.f32 %v1585, 1.442695
      %v1621 = vpow.pop %v1620
      %v1622 = vmul.f32 %v1586, 1.442695
      %v1623 = vpow.pop %v1622
      %v1624 = vmul.f32 %v1587, 1.442695
      %v1625 = vpow.pop %v1624
      %v1626 = vmul.f32 %v1588, 1.442695
      %v1627 = vpow.pop %v1626
      %v1628 = vmul.f32 %v1589, 1.442695
      %v1629 = vpow.pop %v1628
      %v1630 = vmul.f32 %v1590, 1.442695
      %v1631 = vpow.pop %v1630
      %v1632 = vmul.f32 %v1591, 1.442695
      %v1633 = vpow.pop %v1632
      %v1634 = vmul.f32 %v1592, 1.442695
      %v1635 = vpow.pop %v1634
      %v1636 = vmul.f32 %v1593, 1.442695
      %v1637 = vpow.pop %v1636
      %v1638 = vmul.f32 %v1594, 1.442695
      %v1639 = vpow.pop %v1638
      %v1640 = vmul.f32 %v1595, 1.442695
      %v1641 = vpow.pop %v1640
      %v1642 = vmul.f32 %v1596, 1.442695
      %v1643 = vpow.pop %v1642
      %v1644 = vmul.f32 %v1597, 1.442695
      %v1645 = vpow.pop %v1644
      %v1646 = vmul.f32 %v1598, 1.442695
      %v1647 = vpow.pop %v1646
      %v1648 = vmul.f32 %v1599, 1.442695
      %v1649 = vpow.pop %v1648
      %v1650 = vmul.f32 %v1600, 1.442695
      %v1651 = vpow.pop %v1650
      %v1652 = vmul.f32 %v1601, 1.442695
      %v1653 = vpow.pop %v1652
      %v1654 = vmul.f32 %v1602, 1.442695
      %v1655 = vpow.pop %v1654
      %v1656 = vmul.f32 %v1603, 1.442695
      %v1657 = vpow.pop %v1656
      %v1658 = vmul.f32 %v1604, 1.442695
      %v1659 = vpow.pop %v1658
      %v1660 = vmul.f32 %v1605, 1.442695
      %v1661 = vpow.pop %v1660
      %v1662 = vmul.f32 %v1606, 1.442695
      %v1663 = vpow.pop %v1662
      %v1664 = vmul.f32 %v1607, 1.442695
      %v1665 = vpow.pop %v1664
      %v1666 = vmul.f32 %v1608, 1.442695
      %v1667 = vpow.pop %v1666
      %v1668 = vmul.f32 %v1609, 1.442695
      %v1669 = vpow.pop %v1668
      %v1670 = vmul.f32 %v1610, 1.442695
      %v1671 = vpow.pop %v1670
      %v1672 = vmul.f32 %v1611, 1.442695
      %v1673 = vpow.pop %v1672
      %v1674 = vmul.f32 %v1612, 1.442695
      %v1675 = vpow.pop %v1674
      %v1676 = vmul.f32 %v1613, 1.442695
      %v1677 = vpow.pop %v1676
      %v1678 = vadd.f32 %v1615, 1.0
      %v1679 = vadd.f32 %v1617, 1.0
      %v1680 = vadd.f32 %v1619, 1.0
      %v1681 = vadd.f32 %v1621, 1.0
      %v1682 = vadd.f32 %v1623, 1.0
      %v1683 = vadd.f32 %v1625, 1.0
      %v1684 = vadd.f32 %v1627, 1.0
      %v1685 = vadd.f32 %v1629, 1.0
      %v1686 = vadd.f32 %v1631, 1.0
      %v1687 = vadd.f32 %v1633, 1.0
      %v1688 = vadd.f32 %v1635, 1.0
      %v1689 = vadd.f32 %v1637, 1.0
      %v1690 = vadd.f32 %v1639, 1.0
      %v1691 = vadd.f32 %v1641, 1.0
      %v1692 = vadd.f32 %v1643, 1.0
      %v1693 = vadd.f32 %v1645, 1.0
      %v1694 = vadd.f32 %v1647, 1.0
      %v1695 = vadd.f32 %v1649, 1.0
      %v1696 = vadd.f32 %v1651, 1.0
      %v1697 = vadd.f32 %v1653, 1.0
      %v1698 = vadd.f32 %v1655, 1.0
      %v1699 = vadd.f32 %v1657, 1.0
      %v1700 = vadd.f32 %v1659, 1.0
      %v1701 = vadd.f32 %v1661, 1.0
      %v1702 = vadd.f32 %v1663, 1.0
      %v1703 = vadd.f32 %v1665, 1.0
      %v1704 = vadd.f32 %v1667, 1.0
      %v1705 = vadd.f32 %v1669, 1.0
      %v1706 = vadd.f32 %v1671, 1.0
      %v1707 = vadd.f32 %v1673, 1.0
      %v1708 = vadd.f32 %v1675, 1.0
      %v1709 = vadd.f32 %v1677, 1.0
      %v1710 = vrcp.pop %v1678
      %v1711 = vmul.f32 1.0, %v1710
      %v1712 = vrcp.pop %v1679
      %v1713 = vmul.f32 1.0, %v1712
      %v1714 = vrcp.pop %v1680
      %v1715 = vmul.f32 1.0, %v1714
      %v1716 = vrcp.pop %v1681
      %v1717 = vmul.f32 1.0, %v1716
      %v1718 = vrcp.pop %v1682
      %v1719 = vmul.f32 1.0, %v1718
      %v1720 = vrcp.pop %v1683
      %v1721 = vmul.f32 1.0, %v1720
      %v1722 = vrcp.pop %v1684
      %v1723 = vmul.f32 1.0, %v1722
      %v1724 = vrcp.pop %v1685
      %v1725 = vmul.f32 1.0, %v1724
      %v1726 = vrcp.pop %v1686
      %v1727 = vmul.f32 1.0, %v1726
      %v1728 = vrcp.pop %v1687
      %v1729 = vmul.f32 1.0, %v1728
      %v1730 = vrcp.pop %v1688
      %v1731 = vmul.f32 1.0, %v1730
      %v1732 = vrcp.pop %v1689
      %v1733 = vmul.f32 1.0, %v1732
      %v1734 = vrcp.pop %v1690
      %v1735 = vmul.f32 1.0, %v1734
      %v1736 = vrcp.pop %v1691
      %v1737 = vmul.f32 1.0, %v1736
      %v1738 = vrcp.pop %v1692
      %v1739 = vmul.f32 1.0, %v1738
      %v1740 = vrcp.pop %v1693
      %v1741 = vmul.f32 1.0, %v1740
      %v1742 = vrcp.pop %v1694
      %v1743 = vmul.f32 1.0, %v1742
      %v1744 = vrcp.pop %v1695
      %v1745 = vmul.f32 1.0, %v1744
      %v1746 = vrcp.pop %v1696
      %v1747 = vmul.f32 1.0, %v1746
      %v1748 = vrcp.pop %v1697
      %v1749 = vmul.f32 1.0, %v1748
      %v1750 = vrcp.pop %v1698
      %v1751 = vmul.f32 1.0, %v1750
      %v1752 = vrcp.pop %v1699
      %v1753 = vmul.f32 1.0, %v1752
      %v1754 = vrcp.pop %v1700
      %v1755 = vmul.f32 1.0, %v1754
      %v1756 = vrcp.pop %v1701
      %v1757 = vmul.f32 1.0, %v1756
      %v1758 = vrcp.pop %v1702
      %v1759 = vmul.f32 1.0, %v1758
      %v1760 = vrcp.pop %v1703
      %v1761 = vmul.f32 1.0, %v1760
      %v1762 = vrcp.pop %v1704
      %v1763 = vmul.f32 1.0, %v1762
      %v1764 = vrcp.pop %v1705
      %v1765 = vmul.f32 1.0, %v1764
      %v1766 = vrcp.pop %v1706
      %v1767 = vmul.f32 1.0, %v1766
      %v1768 = vrcp.pop %v1707
      %v1769 = vmul.f32 1.0, %v1768
      %v1770 = vrcp.pop %v1708
      %v1771 = vmul.f32 1.0, %v1770
      %v1772 = vrcp.pop %v1709
      %v1773 = vmul.f32 1.0, %v1772
      %v1774 = vtanh.pop %v1519
      %v1775 = vtanh.pop %v1521
      %v1776 = vtanh.pop %v1523
      %v1777 = vtanh.pop %v1525
      %v1778 = vtanh.pop %v1527
      %v1779 = vtanh.pop %v1529
      %v1780 = vtanh.pop %v1531
      %v1781 = vtanh.pop %v1533
      %v1782 = vtanh.pop %v1535
      %v1783 = vtanh.pop %v1537
      %v1784 = vtanh.pop %v1539
      %v1785 = vtanh.pop %v1541
      %v1786 = vtanh.pop %v1543
      %v1787 = vtanh.pop %v1545
      %v1788 = vtanh.pop %v1547
      %v1789 = vtanh.pop %v1549
      %v1790 = vtanh.pop %v1551
      %v1791 = vtanh.pop %v1553
      %v1792 = vtanh.pop %v1555
      %v1793 = vtanh.pop %v1557
      %v1794 = vtanh.pop %v1559
      %v1795 = vtanh.pop %v1561
      %v1796 = vtanh.pop %v1563
      %v1797 = vtanh.pop %v1565
      %v1798 = vtanh.pop %v1567
      %v1799 = vtanh.pop %v1569
      %v1800 = vtanh.pop %v1571
      %v1801 = vtanh.pop %v1573
      %v1802 = vtanh.pop %v1575
      %v1803 = vtanh.pop %v1577
      %v1804 = vtanh.pop %v1579
      %v1805 = vtanh.pop %v1581
      %v1806 = vsub.f32 1.0, %v1711
      %v1807 = vsub.f32 1.0, %v1713
      %v1808 = vsub.f32 1.0, %v1715
      %v1809 = vsub.f32 1.0, %v1717
      %v1810 = vsub.f32 1.0, %v1719
      %v1811 = vsub.f32 1.0, %v1721
      %v1812 = vsub.f32 1.0, %v1723
      %v1813 = vsub.f32 1.0, %v1725
      %v1814 = vsub.f32 1.0, %v1727
      %v1815 = vsub.f32 1.0, %v1729
      %v1816 = vsub.f32 1.0, %v1731
      %v1817 = vsub.f32 1.0, %v1733
      %v1818 = vsub.f32 1.0, %v1735
      %v1819 = vsub.f32 1.0, %v1737
      %v1820 = vsub.f32 1.0, %v1739
      %v1821 = vsub.f32 1.0, %v1741
      %v1822 = vsub.f32 1.0, %v1743
      %v1823 = vsub.f32 1.0, %v1745
      %v1824 = vsub.f32 1.0, %v1747
      %v1825 = vsub.f32 1.0, %v1749
      %v1826 = vsub.f32 1.0, %v1751
      %v1827 = vsub.f32 1.0, %v1753
      %v1828 = vsub.f32 1.0, %v1755
      %v1829 = vsub.f32 1.0, %v1757
      %v1830 = vsub.f32 1.0, %v1759
      %v1831 = vsub.f32 1.0, %v1761
      %v1832 = vsub.f32 1.0, %v1763
      %v1833 = vsub.f32 1.0, %v1765
      %v1834 = vsub.f32 1.0, %v1767
      %v1835 = vsub.f32 1.0, %v1769
      %v1836 = vsub.f32 1.0, %v1771
      %v1837 = vsub.f32 1.0, %v1773
      %v1838 = vmul.f32 %v1806, %v1774
      %v1839 = vmul.f32 %v1807, %v1775
      %v1840 = vmul.f32 %v1808, %v1776
      %v1841 = vmul.f32 %v1809, %v1777
      %v1842 = vmul.f32 %v1810, %v1778
      %v1843 = vmul.f32 %v1811, %v1779
      %v1844 = vmul.f32 %v1812, %v1780
      %v1845 = vmul.f32 %v1813, %v1781
      %v1846 = vmul.f32 %v1814, %v1782
      %v1847 = vmul.f32 %v1815, %v1783
      %v1848 = vmul.f32 %v1816, %v1784
      %v1849 = vmul.f32 %v1817, %v1785
      %v1850 = vmul.f32 %v1818, %v1786
      %v1851 = vmul.f32 %v1819, %v1787
      %v1852 = vmul.f32 %v1820, %v1788
      %v1853 = vmul.f32 %v1821, %v1789
      %v1854 = vmul.f32 %v1822, %v1790
      %v1855 = vmul.f32 %v1823, %v1791
      %v1856 = vmul.f32 %v1824, %v1792
      %v1857 = vmul.f32 %v1825, %v1793
      %v1858 = vmul.f32 %v1826, %v1794
      %v1859 = vmul.f32 %v1827, %v1795
      %v1860 = vmul.f32 %v1828, %v1796
      %v1861 = vmul.f32 %v1829, %v1797
      %v1862 = vmul.f32 %v1830, %v1798
      %v1863 = vmul.f32 %v1831, %v1799
      %v1864 = vmul.f32 %v1832, %v1800
      %v1865 = vmul.f32 %v1833, %v1801
      %v1866 = vmul.f32 %v1834, %v1802
      %v1867 = vmul.f32 %v1835, %v1803
      %v1868 = vmul.f32 %v1836, %v1804
      %v1869 = vmul.f32 %v1837, %v1805
      %v1870 = vmax.f32 %v1838, 0.0
      %v1871 = vmax.f32 %v1839, 0.0
      %v1872 = vmax.f32 %v1840, 0.0
      %v1873 = vmax.f32 %v1841, 0.0
      %v1874 = vmax.f32 %v1842, 0.0
      %v1875 = vmax.f32 %v1843, 0.0
      %v1876 = vmax.f32 %v1844, 0.0
      %v1877 = vmax.f32 %v1845, 0.0
      %v1878 = vmax.f32 %v1846, 0.0
      %v1879 = vmax.f32 %v1847, 0.0
      %v1880 = vmax.f32 %v1848, 0.0
      %v1881 = vmax.f32 %v1849, 0.0
      %v1882 = vmax.f32 %v1850, 0.0
      %v1883 = vmax.f32 %v1851, 0.0
      %v1884 = vmax.f32 %v1852, 0.0
      %v1885 = vmax.f32 %v1853, 0.0
      %v1886 = vmax.f32 %v1854, 0.0
      %v1887 = vmax.f32 %v1855, 0.0
      %v1888 = vmax.f32 %v1856, 0.0
      %v1889 = vmax.f32 %v1857, 0.0
      %v1890 = vmax.f32 %v1858, 0.0
      %v1891 = vmax.f32 %v1859, 0.0
      %v1892 = vmax.f32 %v1860, 0.0
      %v1893 = vmax.f32 %v1861, 0.0
      %v1894 = vmax.f32 %v1862, 0.0
      %v1895 = vmax.f32 %v1863, 0.0
      %v1896 = vmax.f32 %v1864, 0.0
      %v1897 = vmax.f32 %v1865, 0.0
      %v1898 = vmax.f32 %v1866, 0.0
      %v1899 = vmax.f32 %v1867, 0.0
      %v1900 = vmax.f32 %v1868, 0.0
      %v1901 = vmax.f32 %v1869, 0.0
      %v1902 = vpack.c.bf16 %v1871, %v1870
      %v1903 = vpack.c.bf16 %v1873, %v1872
      %v1904 = vpack.c.bf16 %v1875, %v1874
      %v1905 = vpack.c.bf16 %v1877, %v1876
      %v1906 = vpack.c.bf16 %v1879, %v1878
      %v1907 = vpack.c.bf16 %v1881, %v1880
      %v1908 = vpack.c.bf16 %v1883, %v1882
      %v1909 = vpack.c.bf16 %v1885, %v1884
      %v1910 = vpack.c.bf16 %v1887, %v1886
      %v1911 = vpack.c.bf16 %v1889, %v1888
      %v1912 = vpack.c.bf16 %v1891, %v1890
      %v1913 = vpack.c.bf16 %v1893, %v1892
      %v1914 = vpack.c.bf16 %v1895, %v1894
      %v1915 = vpack.c.bf16 %v1897, %v1896
      %v1916 = vpack.c.bf16 %v1899, %v1898
      %v1917 = vpack.c.bf16 %v1901, %v1900
      %v1918 = vld [vmem:[#allocation14] sm:$0xf]
      %v1919 = vld [vmem:[#allocation14 + $0x4] sm:$0xf]
      %v1920 = vld [vmem:[#allocation14 + $0x8] sm:$0xf]
      %v1921 = vld [vmem:[#allocation14 + $0xc] sm:$0xf]
      %v1922 = vld [vmem:[#allocation14 + $0x10] sm:$0xf]
      %v1923 = vld [vmem:[#allocation14 + $0x14] sm:$0xf]
      %v1924 = vld [vmem:[#allocation14 + $0x18] sm:$0xf]
      %v1925 = vld [vmem:[#allocation14 + $0x1c] sm:$0xf]
      %v1926 = vld [vmem:[#allocation14 + $0x20] sm:$0xf]
      %v1927 = vld [vmem:[#allocation14 + $0x24] sm:$0xf]
      %v1928 = vld [vmem:[#allocation14 + $0x28] sm:$0xf]
      %v1929 = vld [vmem:[#allocation14 + $0x2c] sm:$0xf]
      %v1930 = vld [vmem:[#allocation14 + $0x30] sm:$0xf]
      %v1931 = vld [vmem:[#allocation14 + $0x34] sm:$0xf]
      %v1932 = vld [vmem:[#allocation14 + $0x38] sm:$0xf]
      %v1933 = vld [vmem:[#allocation14 + $0x3c] sm:$0xf]
      %v1934 = vld [vmem:[#allocation15] sm:$0x1]
      %v1936 = vlaneseq
      %v1937 = vshrl.u32 %v1936, 7
      %v1938 = vsub.s32 0, %v1937
      %v1939 = vrot.slane %v1934, %v1938
      %v1957 = vunpack.c.l.b16 %v1918
      %v1958 = vunpack.c.l.b16 %v1919
      %v1959 = vunpack.c.l.b16 %v1920
      %v1960 = vunpack.c.l.b16 %v1921
      %v1961 = vunpack.c.l.b16 %v1922
      %v1962 = vunpack.c.l.b16 %v1923
      %v1963 = vunpack.c.l.b16 %v1924
      %v1964 = vunpack.c.l.b16 %v1925
      %v1965 = vunpack.c.l.b16 %v1926
      %v1966 = vunpack.c.l.b16 %v1927
      %v1967 = vunpack.c.l.b16 %v1928
      %v1968 = vunpack.c.l.b16 %v1929
      %v1969 = vunpack.c.l.b16 %v1930
      %v1970 = vunpack.c.l.b16 %v1931
      %v1971 = vunpack.c.l.b16 %v1932
      %v1972 = vunpack.c.l.b16 %v1933
      %v1973 = vpack.c.b16 %v1958, %v1957
      %v1974 = vpack.c.b16 %v1960, %v1959
      %v1975 = vpack.c.b16 %v1962, %v1961
      %v1976 = vpack.c.b16 %v1964, %v1963
      %v1977 = vpack.c.b16 %v1966, %v1965
      %v1978 = vpack.c.b16 %v1968, %v1967
      %v1979 = vpack.c.b16 %v1970, %v1969
      %v1980 = vpack.c.b16 %v1972, %v1971
      %1989 = vmatprep.subr.bf16.mxu0 0
      %1990 = vmatpush1.bf16.msra.mxu0 %v1973
      %1991 = vmatprep.subr.bf16.mxu0 0
      %1992 = vmatpush1.bf16.msra.mxu0 %v1974
      %1993 = vmatprep.subr.bf16.mxu0 0
      %1994 = vmatpush1.bf16.msra.mxu0 %v1975
      %1995 = vmatprep.subr.bf16.mxu0 0
      %1996 = vmatpush1.bf16.msra.mxu0 %v1976
      %1997 = vmatprep.subr.bf16.mxu0 0
      %1998 = vmatpush1.bf16.msra.mxu0 %v1977
      %1999 = vmatprep.subr.bf16.mxu0 0
      %2000 = vmatpush1.bf16.msra.mxu0 %v1978
      %2001 = vmatprep.subr.bf16.mxu0 0
      %2002 = vmatpush1.bf16.msra.mxu0 %v1979
      %2003 = vmatprep.subr.bf16.mxu0 0
      %2004 = vmatpush1.bf16.msra.mxu0 %v1980
      %2005 = vmatprep.subr.bf16.mxu0 0
      %2006 = vmatpush1.bf16.msra.mxu0 0
      %2007 = vmatprep.subr.bf16.mxu0 0
      %2008 = vmatpush1.bf16.msra.mxu0 0
      %2009 = vmatprep.subr.bf16.mxu0 0
      %2010 = vmatpush1.bf16.msra.mxu0 0
      %2011 = vmatprep.subr.bf16.mxu0 0
      %2012 = vmatpush1.bf16.msra.mxu0 0
      %2013 = vmatprep.subr.bf16.mxu0 0
      %2014 = vmatpush1.bf16.msra.mxu0 0
      %2015 = vmatprep.subr.bf16.mxu0 0
      %2016 = vmatpush1.bf16.msra.mxu0 0
      %2017 = vmatprep.subr.bf16.mxu0 0
      %2018 = vmatpush1.bf16.msra.mxu0 0
      %2019 = vmatprep.subr.bf16.mxu0 0
      %2020 = vmatpush1.bf16.msra.mxu0 0
      %2021 = vmatprep.mubr.bf16.mxu0 0
      %2022 = vmatmul.mubr.bf16.gmra.mrb[0].mxu0 %v1902
      %v2023 = vpop.f32.mrb[0].mxu0
      %v2024 = vadd.f32 %v1939, %v2023
      %v2025 = vpop.f32.mrb[0].mxu0
      %v2026 = vpop.f32.mrb[0].mxu0
      %v2027 = vadd.f32 %v1939, %v2026
      %v2028 = vpop.f32.mrb[0].mxu0
      %2029 = vmatprep.mubr.bf16.mxu0 0
      %2030 = vmatmul.mubr.bf16.gmra.mrb[0].mxu0 %v1903
      %v2031 = vpop.f32.mrb[0].mxu0
      %v2032 = vadd.f32 %v1939, %v2031
      %v2033 = vpop.f32.mrb[0].mxu0
      %v2034 = vpop.f32.mrb[0].mxu0
      %v2035 = vadd.f32 %v1939, %v2034
      %v2036 = vpop.f32.mrb[0].mxu0
      %2037 = vmatprep.mubr.bf16.mxu0 0
      %2038 = vmatmul.mubr.bf16.gmra.mrb[0].mxu0 %v1904
      %v2039 = vpop.f32.mrb[0].mxu0
      %v2040 = vadd.f32 %v1939, %v2039
      %v2041 = vpop.f32.mrb[0].mxu0
      %v2042 = vpop.f32.mrb[0].mxu0
      %v2043 = vadd.f32 %v1939, %v2042
      %v2044 = vpop.f32.mrb[0].mxu0
      %2045 = vmatprep.mubr.bf16.mxu0 0
      %2046 = vmatmul.mubr.bf16.gmra.mrb[0].mxu0 %v1905
      %v2047 = vpop.f32.mrb[0].mxu0
      %v2048 = vadd.f32 %v1939, %v2047
      %v2049 = vpop.f32.mrb[0].mxu0
      %v2050 = vpop.f32.mrb[0].mxu0
      %v2051 = vadd.f32 %v1939, %v2050
      %v2052 = vpop.f32.mrb[0].mxu0
      %2053 = vmatprep.mubr.bf16.mxu0 0
      %2054 = vmatmul.mubr.bf16.gmra.mrb[0].mxu0 %v1906
      %v2055 = vpop.f32.mrb[0].mxu0
      %v2056 = vadd.f32 %v1939, %v2055
      %v2057 = vpop.f32.mrb[0].mxu0
      %v2058 = vpop.f32.mrb[0].mxu0
      %v2059 = vadd.f32 %v1939, %v2058
      %v2060 = vpop.f32.mrb[0].mxu0
      %2061 = vmatprep.mubr.bf16.mxu0 0
      %2062 = vmatmul.mubr.bf16.gmra.mrb[0].mxu0 %v1907
      %v2063 = vpop.f32.mrb[0].mxu0
      %v2064 = vadd.f32 %v1939, %v2063
      %v2065 = vpop.f32.mrb[0].mxu0
      %v2066 = vpop.f32.mrb[0].mxu0
      %v2067 = vadd.f32 %v1939, %v2066
      %v2068 = vpop.f32.mrb[0].mxu0
      %2069 = vmatprep.mubr.bf16.mxu0 0
      %2070 = vmatmul.mubr.bf16.gmra.mrb[0].mxu0 %v1908
      %v2071 = vpop.f32.mrb[0].mxu0
      %v2072 = vadd.f32 %v1939, %v2071
      %v2073 = vpop.f32.mrb[0].mxu0
      %v2074 = vpop.f32.mrb[0].mxu0
      %v2075 = vadd.f32 %v1939, %v2074
      %v2076 = vpop.f32.mrb[0].mxu0
      %2077 = vmatprep.mubr.bf16.mxu0 0
      %2078 = vmatmul.mubr.bf16.gmra.mrb[0].mxu0 %v1909
      %v2079 = vpop.f32.mrb[0].mxu0
      %v2080 = vadd.f32 %v1939, %v2079
      %v2081 = vpop.f32.mrb[0].mxu0
      %v2082 = vpop.f32.mrb[0].mxu0
      %v2083 = vadd.f32 %v1939, %v2082
      %v2084 = vpop.f32.mrb[0].mxu0
      %2085 = vmatprep.mubr.bf16.mxu0 0
      %2086 = vmatmul.mubr.bf16.gmra.mrb[0].mxu0 %v1910
      %v2087 = vpop.f32.mrb[0].mxu0
      %v2088 = vadd.f32 %v1939, %v2087
      %v2089 = vpop.f32.mrb[0].mxu0
      %v2090 = vpop.f32.mrb[0].mxu0
      %v2091 = vadd.f32 %v1939, %v2090
      %v2092 = vpop.f32.mrb[0].mxu0
      %2093 = vmatprep.mubr.bf16.mxu0 0
      %2094 = vmatmul.mubr.bf16.gmra.mrb[0].mxu0 %v1911
      %v2095 = vpop.f32.mrb[0].mxu0
      %v2096 = vadd.f32 %v1939, %v2095
      %v2097 = vpop.f32.mrb[0].mxu0
      %v2098 = vpop.f32.mrb[0].mxu0
      %v2099 = vadd.f32 %v1939, %v2098
      %v2100 = vpop.f32.mrb[0].mxu0
      %2101 = vmatprep.mubr.bf16.mxu0 0
      %2102 = vmatmul.mubr.bf16.gmra.mrb[0].mxu0 %v1912
      %v2103 = vpop.f32.mrb[0].mxu0
      %v2104 = vadd.f32 %v1939, %v2103
      %v2105 = vpop.f32.mrb[0].mxu0
      %v2106 = vpop.f32.mrb[0].mxu0
      %v2107 = vadd.f32 %v1939, %v2106
      %v2108 = vpop.f32.mrb[0].mxu0
      %2109 = vmatprep.mubr.bf16.mxu0 0
      %2110 = vmatmul.mubr.bf16.gmra.mrb[0].mxu0 %v1913
      %v2111 = vpop.f32.mrb[0].mxu0
      %v2112 = vadd.f32 %v1939, %v2111
      %v2113 = vpop.f32.mrb[0].mxu0
      %v2114 = vpop.f32.mrb[0].mxu0
      %v2115 = vadd.f32 %v1939, %v2114
      %v2116 = vpop.f32.mrb[0].mxu0
      %2117 = vmatprep.mubr.bf16.mxu0 0
      %2118 = vmatmul.mubr.bf16.gmra.mrb[0].mxu0 %v1914
      %v2119 = vpop.f32.mrb[0].mxu0
      %v2120 = vadd.f32 %v1939, %v2119
      %v2121 = vpop.f32.mrb[0].mxu0
      %v2122 = vpop.f32.mrb[0].mxu0
      %v2123 = vadd.f32 %v1939, %v2122
      %v2124 = vpop.f32.mrb[0].mxu0
      %2125 = vmatprep.mubr.bf16.mxu0 0
      %2126 = vmatmul.mubr.bf16.gmra.mrb[0].mxu0 %v1915
      %v2127 = vpop.f32.mrb[0].mxu0
      %v2128 = vadd.f32 %v1939, %v2127
      %v2129 = vpop.f32.mrb[0].mxu0
      %v2130 = vpop.f32.mrb[0].mxu0
      %v2131 = vadd.f32 %v1939, %v2130
      %v2132 = vpop.f32.mrb[0].mxu0
      %2133 = vmatprep.mubr.bf16.mxu0 0
      %2134 = vmatmul.mubr.bf16.gmra.mrb[0].mxu0 %v1916
      %v2135 = vpop.f32.mrb[0].mxu0
      %v2136 = vadd.f32 %v1939, %v2135
      %v2137 = vpop.f32.mrb[0].mxu0
      %v2138 = vpop.f32.mrb[0].mxu0
      %v2139 = vadd.f32 %v1939, %v2138
      %v2140 = vpop.f32.mrb[0].mxu0
      %2141 = vmatprep.mubr.bf16.mxu0 0
      %2142 = vmatmul.mubr.bf16.gmra.mrb[0].mxu0 %v1917
      %v2143 = vpop.f32.mrb[0].mxu0
      %v2144 = vadd.f32 %v1939, %v2143
      %v2145 = vpop.f32.mrb[0].mxu0
      %v2146 = vpop.f32.mrb[0].mxu0
      %v2147 = vadd.f32 %v1939, %v2146
      %v2148 = vpop.f32.mrb[0].mxu0
      %2149 = vdwg.mxu0
      %2150 = vst [vmem:[#allocation17] sm:$0xff] %v2024
      %2151 = vst [vmem:[#allocation17 + $0x8] sm:$0xff] %v2027
      %2152 = vst [vmem:[#allocation17 + $0x10] sm:$0xff] %v2032
      %2153 = vst [vmem:[#allocation17 + $0x18] sm:$0xff] %v2035
      %2154 = vst [vmem:[#allocation17 + $0x20] sm:$0xff] %v2040
      %2155 = vst [vmem:[#allocation17 + $0x28] sm:$0xff] %v2043
      %2156 = vst [vmem:[#allocation17 + $0x30] sm:$0xff] %v2048
      %2157 = vst [vmem:[#allocation17 + $0x38] sm:$0xff] %v2051
      %2158 = vst [vmem:[#allocation17 + $0x40] sm:$0xff] %v2056
      %2159 = vst [vmem:[#allocation17 + $0x48] sm:$0xff] %v2059
      %2160 = vst [vmem:[#allocation17 + $0x50] sm:$0xff] %v2064
      %2161 = vst [vmem:[#allocation17 + $0x58] sm:$0xff] %v2067
      %2162 = vst [vmem:[#allocation17 + $0x60] sm:$0xff] %v2072
      %2163 = vst [vmem:[#allocation17 + $0x68] sm:$0xff] %v2075
      %2164 = vst [vmem:[#allocation17 + $0x70] sm:$0xff] %v2080
      %2165 = vst [vmem:[#allocation17 + $0x78] sm:$0xff] %v2083
      %2166 = vst [vmem:[#allocation17 + $0x80] sm:$0xff] %v2088
      %2167 = vst [vmem:[#allocation17 + $0x88] sm:$0xff] %v2091
      %2168 = vst [vmem:[#allocation17 + $0x90] sm:$0xff] %v2096
      %2169 = vst [vmem:[#allocation17 + $0x98] sm:$0xff] %v2099
      %2170 = vst [vmem:[#allocation17 + $0xa0] sm:$0xff] %v2104
      %2171 = vst [vmem:[#allocation17 + $0xa8] sm:$0xff] %v2107
      %2172 = vst [vmem:[#allocation17 + $0xb0] sm:$0xff] %v2112
      %2173 = vst [vmem:[#allocation17 + $0xb8] sm:$0xff] %v2115
      %2174 = vst [vmem:[#allocation17 + $0xc0] sm:$0xff] %v2120
      %2175 = vst [vmem:[#allocation17 + $0xc8] sm:$0xff] %v2123
      %2176 = vst [vmem:[#allocation17 + $0xd0] sm:$0xff] %v2128
      %2177 = vst [vmem:[#allocation17 + $0xd8] sm:$0xff] %v2131
      %2178 = vst [vmem:[#allocation17 + $0xe0] sm:$0xff] %v2136
      %2179 = vst [vmem:[#allocation17 + $0xe8] sm:$0xff] %v2139
      %2180 = vst [vmem:[#allocation17 + $0xf0] sm:$0xff] %v2144
      %2181 = vst [vmem:[#allocation17 + $0xf8] sm:$0xff] %v2147
    $region73: #{tpu_custom_call.1} parent=1 // pred_fallthru
      _
    // Predicated region
    $region74: #{tpu_custom_call.1} parent=1 // pred_check
      _
    $region75: #{tpu_custom_call.1} parent=1 // pred_check_branch
      %2183 = sbr.rel (0) target = $region77
    $region76: #{tpu_custom_call.1} parent=1 // pred_region
      %s2185 = ssub.s32 4096, 4096
      %2186 = vsyncadd [#allocation5], %s2185
      %s2187 = sshll.u32 [#allocation17], 4
      %s2188 = int_to_ptr.vmem [resolvable:$true] %s2187
      %2193 = dma.vmem_to_hbm [thread:$0]  %s2188, 4096, %s8, [#allocation5], 128, 128, 8
    $region77: #{tpu_custom_call.1} parent=1 // pred_fallthru
      _
    // Predicated region
    $region78: #{tpu_custom_call.1} parent=1 // pred_check
      _
    $region79: #{tpu_custom_call.1} parent=1 // pred_check_branch
      %2195 = sbr.rel (0) target = $region81
    $region80: #{tpu_custom_call.1} parent=1 // pred_region
      %2196 = dma.done [#allocation5], 4096
    $region81: #{tpu_custom_call.1} parent=1 // pred_fallthru
      _
    %2197 = vsyncpa [#allocation4], 1
    %2198 = vsyncpa [#allocation7], 1
    %2199 = vsyncpa [#allocation10], 1
    %2200 = vsyncpa [#allocation13], 1
    %2201 = vsyncpa [#allocation16], 1
    %2202 = vsyncpa [#allocation5], 1

</llo_original>
